<compile_context>
chip_gen: v7x
topology: tpu7x:2x2x1
jax: 0.10.0
libtpu: 0.0.40
codegen_flags: <defaults>
</compile_context>

<pallas_src>
import functools

import jax
import jax.numpy as jnp
from jax.experimental import pallas as pl
from jax.experimental.pallas import tpu as pltpu

# Set to jnp.bfloat16 for production shapes (perf-review item); float32 keeps the
# numerical self-check at a tight bound for this validation config.
MXU_DTYPE = jnp.float32

_VMEM = pl.BlockSpec(memory_space=pltpu.MemorySpace.VMEM)   # whole array resident in VMEM


# ----------------------------------- fused kernel --------------------------------------

def _stconv_kernel(x_ref, w1_ref, b1_ref, agc_ref, bgc_ref, l_ref, wc_ref, cb_ref,
                   w3_ref, b3_ref, mln_ref, gam_ref, bet_ref, o_ref, *,
                   B, V, T, Kt, Ks, c1, cgc, c2):
    f32 = jnp.float32
    mdt = w1_ref.dtype
    T1 = T - (Kt - 1)
    T2 = T1 - (Kt - 1)
    M = B * cgc * T1            # columns of the quirky ChebConv view x0 = flat.reshape(V, M)
    tpr = M // V                # time steps covered by one x0 row
    rpc = V // (B * cgc)        # x0 rows spanned by one (batch, channel) slab

    # ---- stage 1: temporal conv 1 (+ folded GLU x_in / Align) + GLU + graph-conv Align --
    # Per-batch channel-major activations: rows = channel, lanes = t*V + vertex.
    g_list = []
    for b in range(B):
        xb = x_ref[b]                                               # (c_in, T*V)
        # Kt taps stacked along the reduction axis (in-VMEM im2col, review item).
        im1 = jnp.concatenate(
            [xb[:, dt * V: dt * V + T1 * V] for dt in range(Kt)], axis=0)    # (Kt*c_in, T1*V)
        # p and q gates come out of ONE matmul (rows [:c1] / [c1:]); GLU x_in is folded in.
        pq = jnp.dot(w1_ref[...], im1.astype(mdt),
                     preferred_element_type=f32) + b1_ref[...]       # (2*c1, T1*V)
        h = pq[:c1, :] * jax.nn.sigmoid(pq[c1:, :])                  # GLU
        g = jnp.dot(agc_ref[...], h.astype(mdt),
                    preferred_element_type=f32) + bgc_ref[...]       # (cgc, T1*V)
        g_list.append(g)

    # ---- stage 2: ChebConv on the exact torch layout x0 = nchw_flat.reshape(V, M) -------
    # Built from static lane-slices only (no transposes / reshapes on values).
    rows = []
    for b in range(B):
        for c in range(cgc):
            for r in range(rpc):
                rows.append(g_list[b][c:c + 1, r * M:(r + 1) * M])
    x0 = jnp.concatenate(rows, axis=0)                               # (V, M)

    # Chebyshev recurrence: L applied as a dense (V, V) operator (no kron(L, I) blow-up).
    x_list = [x0]
    if Ks >= 2:
        x_list.append(jnp.dot(l_ref[...], x0.astype(mdt), preferred_element_type=f32))
    for k in range(2, Ks):
        x_list.append(2.0 * jnp.dot(l_ref[...], x_list[k - 1].astype(mdt),
                                    preferred_element_type=f32) - x_list[k - 2])

    # Torch's quirky view(-1, Ks*c_in) @ weight.view(Ks*c_in, -1): each 16-lane chunk of
    # x0 is one row-group of that view, so the whole contraction is a small matmul per
    # chunk against the pre-packed (Ks*V, V) block weight.
    y_chunks = []
    for s in range(tpr):
        sl = slice(s * V, (s + 1) * V)
        lhs = jnp.concatenate([xk[:, sl] for xk in x_list], axis=1)            # (V, Ks*V)
        y_chunks.append(jnp.dot(lhs.astype(mdt), wc_ref[...],
                                preferred_element_type=f32))                   # (V, V)
    y = jnp.concatenate(y_chunks, axis=1) + cb_ref[...]                        # (V, M)

    act = jnp.maximum(y + x0, 0.0)       # residual (x_gc_in == x0 in this view) + ReLU

    # ---- stage 3: temporal conv 2 + GLU + LayerNorm([n_vertex, c2]) ---------------------
    for b in range(B):
        # Rebuild per-batch channel-major rows from the x0-layout rows (slices + concat).
        cm_rows = []
        for c in range(cgc):
            r0 = b * (cgc * rpc) + c * rpc
            cm_rows.append(jnp.concatenate(
                [act[r0 + r: r0 + r + 1, :] for r in range(rpc)], axis=1))     # (1, T1*V)
        a_cm = jnp.concatenate(cm_rows, axis=0)                                # (cgc, T1*V)

        im2 = jnp.concatenate(
            [a_cm[:, dt * V: dt * V + T2 * V] for dt in range(Kt)], axis=0)    # (Kt*cgc, T2*V)
        pq2 = jnp.dot(w3_ref[...], im2.astype(mdt),
                      preferred_element_type=f32) + b3_ref[...]                # (2*c2, T2*V)
        h2 = pq2[:c2, :] * jax.nn.sigmoid(pq2[c2:, :])                         # (c2, T2*V)

        # LayerNorm group for one (b, t) = all c2 rows x the V lanes of that time step.
        # Per-group mean / E[x^2] are broadcast back with a block-diagonal averaging
        # matmul (keeps the kernel free of value reshapes).
        ssum = jnp.sum(h2, axis=0, keepdims=True)                              # (1, T2*V)
        ssq = jnp.sum(h2 * h2, axis=0, keepdims=True)
        mean = jnp.dot(ssum, mln_ref[...], preferred_element_type=f32)         # (1, T2*V)
        ex2 = jnp.dot(ssq, mln_ref[...], preferred_element_type=f32)
        var = ex2 - mean * mean
        o_ref[b] = ((h2 - mean) * jax.lax.rsqrt(var + 1e-5)
                    * gam_ref[...] + bet_ref[...])
        # TODO(synk): nn.Dropout is applied as eval-mode identity (no train-mode PRNG mask).


# -------------------- parameter-only preprocessing (hoisted, done once) ------------------

def _fold_align(c_in, c_out, w=None, b=None):
    """Align(x) per (b, t, v) as a channel map: x_al[o] = sum_c A[o, c] x[c] + bvec[o]."""
    if c_in > c_out:          # 1x1 conv path
        return jnp.asarray(w, jnp.float32), jnp.asarray(b, jnp.float32)
    if c_in < c_out:          # zero-pad channels path
        a = jnp.concatenate([jnp.eye(c_in, dtype=jnp.float32),
                             jnp.zeros((c_out - c_in, c_in), jnp.float32)], axis=0)
        return a, jnp.zeros((c_out,), jnp.float32)
    return jnp.eye(c_in, dtype=jnp.float32), jnp.zeros((c_out,), jnp.float32)


def _prep_temporal(conv_w, conv_b, c_in, c_out, Kt, align_w=None, align_b=None):
    """Pack CausalConv2d((Kt,1)) + the GLU x_in term into one (2*c_out, Kt*c_in) weight.

    Row o, column dt*c_in + c == conv_w[o, c, dt]; the Align/x_in map is folded into the
    p rows at the last tap (x_in = align(x)[:, :, Kt-1:, :]).
    """
    conv_w = jnp.asarray(conv_w, jnp.float32)            # (2*c_out, c_in, Kt)
    conv_b = jnp.asarray(conv_b, jnp.float32)            # (2*c_out,)
    w = jnp.transpose(conv_w, (0, 2, 1)).reshape(2 * c_out, Kt * c_in)
    a, bvec = _fold_align(c_in, c_out, align_w, align_b)
    w = w.at[:c_out, (Kt - 1) * c_in:].add(a)
    bias = conv_b + jnp.concatenate([bvec, jnp.zeros((c_out,), jnp.float32)])
    return w.astype(MXU_DTYPE), bias.reshape(2 * c_out, 1)


def _prep_cheb(cheb_w, cheb_b, Ks, c, V, M):
    """Torch's quirky weight.view(Ks*c_in, -1) contraction as (V, V) per-chunk blocks."""
    wv = jnp.asarray(cheb_w, jnp.float32).reshape(Ks * c, c)
    eye_vc = jnp.eye(V // c, dtype=jnp.float32)
    wc = jnp.concatenate([jnp.kron(eye_vc, wv[k::Ks, :]) for k in range(Ks)], axis=0)
    bias_row = jnp.tile(jnp.asarray(cheb_b, jnp.float32), M // c).reshape(1, M)
    return wc.astype(MXU_DTYPE), bias_row


def make_st_conv_block(params, L, *, Kt, Ks, n_vertex, channels,
                       batch, in_channels, n_timesteps):
    """Build the fused forward; all weight packing runs here exactly once (review item)."""
    B, C0, T, V = batch, in_channels, n_timesteps, n_vertex
    c1, cgc, c2 = channels
    T1 = T - (Kt - 1)
    T2 = T1 - (Kt - 1)
    M = B * cgc * T1
    # TODO(synk): shape families violating these divisibilities need the explicit
    # reshape-based ChebConv path; not required for this configuration.
    assert Ks >= 1 and M % V == 0 and V % cgc == 0 and V % (B * cgc) == 0 and V % B == 0

    w1, b1 = _prep_temporal(params['tc1']['conv_w'], params['tc1']['conv_b'],
                            C0, c1, Kt, params['tc1'].get('align_w'),
                            params['tc1'].get('align_b'))
    a_gc, bv_gc = _fold_align(c1, cgc, params['gc'].get('align_w'),
                              params['gc'].get('align_b'))
    a_gc = a_gc.astype(MXU_DTYPE)
    b_gc = bv_gc.reshape(cgc, 1)
    wc, cbias = _prep_cheb(params['gc']['cheb_w'], params['gc']['cheb_b'], Ks, cgc, V, M)
    w3, b3 = _prep_temporal(params['tc2']['conv_w'], params['tc2']['conv_b'],
                            cgc, c2, Kt, params['tc2'].get('align_w'),
                            params['tc2'].get('align_b'))
    lm = jnp.asarray(L, MXU_DTYPE)

    # LayerNorm([n_vertex, c2]) constants in the kernel's (channel-row, t*V+vert) layout.
    mln = (jnp.kron(jnp.eye(T2, dtype=jnp.float32), jnp.ones((V, V), jnp.float32))
           / float(V * c2))                                          # (T2*V, T2*V)
    assert jnp.asarray(params['ln_g']).size == V * c2
    ln_g2 = jnp.asarray(params['ln_g'], jnp.float32).reshape(V, c2)
    ln_b2 = jnp.asarray(params['ln_b'], jnp.float32).reshape(V, c2)
    gam = jnp.tile(ln_g2.T, (1, T2))                                 # (c2, T2*V)
    bet = jnp.tile(ln_b2.T, (1, T2))

    kernel = functools.partial(_stconv_kernel, B=B, V=V, T=T, Kt=Kt, Ks=Ks,
                               c1=c1, cgc=cgc, c2=c2)
    call = pl.pallas_call(
        kernel,
        out_shape=jax.ShapeDtypeStruct((B, c2, T2 * V), jnp.float32),
        in_specs=[_VMEM] * 13,
        out_specs=_VMEM,
        compiler_params=pltpu.CompilerParams(vmem_limit_bytes=32 * 1024 * 1024),
    )

    @jax.jit
    def forward(x):
        assert x.shape == (B, C0, T, V), x.shape
        x2 = jnp.asarray(x, jnp.float32).reshape(B, C0, T * V)   # free row-major reshape
        out = call(x2, w1, b1, a_gc, b_gc, lm, wc, cbias, w3, b3, mln, gam, bet)
        return out.reshape(B, c2, T2, V)                          # free row-major reshape

    return forward


# ---------------------- pure-jnp reference (faithful torch transcription) ----------------

def _reference_forward(x, params, L, *, Kt, Ks, n_vertex, channels):
    def align(xx, c_out, w=None, bvec=None):
        bb, c_in, tt, vv = xx.shape
        if c_in > c_out:
            return jnp.einsum('oc,bctv->botv', w, xx) + bvec[None, :, None, None]
        if c_in < c_out:
            return jnp.concatenate(
                [xx, jnp.zeros((bb, c_out - c_in, tt, vv), xx.dtype)], axis=1)
        return xx

    def causal_conv(xx, w, bvec):
        kt = w.shape[-1]
        t_out = xx.shape[2] - kt + 1
        out = bvec[None, :, None, None]
        for dt in range(kt):
            out = out + jnp.einsum('oc,bctv->botv', w[:, :, dt], xx[:, :, dt:dt + t_out, :])
        return out

    def temporal(xx, p, c_out):
        x_in = align(xx, c_out, p.get('align_w'), p.get('align_b'))[:, :, Kt - 1:, :]
        cc = causal_conv(xx, p['conv_w'], p['conv_b'])
        return (cc[:, :c_out] + x_in) * jax.nn.sigmoid(cc[:, -c_out:])

    x_tc1 = temporal(x, params['tc1'], channels[0])
    gcp = params['gc']
    x_gc_in = align(x_tc1, channels[1], gcp.get('align_w'), gcp.get('align_b'))
    bsz, c_in, t1, vv = x_gc_in.shape
    x0 = x_gc_in.reshape(n_vertex, -1)
    x_list = [x0]
    if Ks - 1 >= 1:
        x_list.append(L @ x0)
    for kk in range(2, Ks):
        x_list.append(2.0 * (L @ x_list[kk - 1]) - x_list[kk - 2])
    xt = jnp.stack(x_list, axis=2)
    xm = xt.reshape(-1, Ks * c_in) @ gcp['cheb_w'].reshape(Ks * c_in, -1) + gcp['cheb_b']
    x_gc = xm.reshape(bsz, channels[1], t1, vv)
    x_act = jnp.maximum(x_gc + x_gc_in, 0.0)
    x_tc2 = temporal(x_act, params['tc2'], channels[2])
    bsz, c2, t2, vv = x_tc2.shape
    xp = x_tc2.transpose(0, 2, 3, 1)
    mean = xp.mean(axis=(-2, -1), keepdims=True)
    var = ((xp - mean) ** 2).mean(axis=(-2, -1), keepdims=True)
    gamma = params['ln_g'].reshape(1, 1, vv, c2)
    beta = params['ln_b'].reshape(1, 1, vv, c2)
    x_ln = (xp - mean) * jax.lax.rsqrt(var + 1e-5) * gamma + beta
    return x_ln.transpose(0, 3, 1, 2)


# ------------------------------- deterministic setup & run -------------------------------

if __name__ == "__main__":
    Kt, Ks = 3, 3
    n_vertex = 16
    B, T = 2, 16
    last_block_channel = 4
    channels = (8, 4, 8)

    key = jax.random.PRNGKey(0)
    k = jax.random.split(key, 8)

    x = jax.random.normal(k[0], (B, last_block_channel, T, n_vertex), jnp.float32)
    L = 0.3 * jax.random.normal(k[1], (n_vertex, n_vertex), jnp.float32)   # graph_conv_matrix

    params = {
        'tc1': {  # CausalConv2d(last_block_channel, 2*channels[0], (Kt,1))
            'conv_w': 0.2 * jax.random.normal(
                k[2], (2 * channels[0], last_block_channel, Kt), jnp.float32),
            'conv_b': jnp.zeros((2 * channels[0],), jnp.float32),
        },
        'gc': {   # Align 1x1 conv (8 -> 4) + ChebConv(4, 4, Ks)
            'align_w': 0.2 * jax.random.normal(k[3], (channels[1], channels[0]), jnp.float32),
            'align_b': 0.1 * jax.random.normal(k[4], (channels[1],), jnp.float32),
            'cheb_w': 0.2 * jax.random.normal(k[5], (Ks, channels[1], channels[1]), jnp.float32),
            'cheb_b': jnp.zeros((channels[1],), jnp.float32),   # init.zeros_(bias) in torch
        },
        'tc2': {  # CausalConv2d(channels[1], 2*channels[2], (Kt,1))
            'conv_w': 0.2 * jax.random.normal(
                k[6], (2 * channels[2], channels[1], Kt), jnp.float32),
            'conv_b': 0.1 * jax.random.normal(k[7], (2 * channels[2],), jnp.float32),
        },
        'ln_g': jnp.ones((n_vertex * channels[2],), jnp.float32),   # LayerNorm default init
        'ln_b': jnp.zeros((n_vertex * channels[2],), jnp.float32),
    }

    fwd = make_st_conv_block(params, L, Kt=Kt, Ks=Ks, n_vertex=n_vertex, channels=channels,
                             batch=B, in_channels=last_block_channel, n_timesteps=T)
    out = jax.block_until_ready(fwd(x))

    expected = (B, channels[2], T - 2 * (Kt - 1), n_vertex)   # (2, 8, 12, 16)
    assert out.shape == expected, (out.shape, expected)
    assert out.dtype == jnp.float32

    ref = jax.block_until_ready(
        _reference_forward(x, params, L, Kt=Kt, Ks=Ks, n_vertex=n_vertex, channels=channels))
    err = float(jnp.max(jnp.abs(out - ref)))
    tol = 2e-3 if MXU_DTYPE == jnp.float32 else 8e-2   # tight bound for the f32 default
    assert err < tol, f"fused kernel diverges from reference (max abs err {err})"
    print("KERNEL_OK")
</pallas_src>

<mosaic_0001>
module attributes {stable_mosaic.version = 11 : i64} {
  func.func @_stconv_kernel(%arg0: memref<2x4x256xf32, #tpu.memory_space<vmem>>, %arg1: memref<16x12xf32, #tpu.memory_space<vmem>>, %arg2: memref<16x1xf32, #tpu.memory_space<vmem>>, %arg3: memref<4x8xf32, #tpu.memory_space<vmem>>, %arg4: memref<4x1xf32, #tpu.memory_space<vmem>>, %arg5: memref<16x16xf32, #tpu.memory_space<vmem>>, %arg6: memref<48x16xf32, #tpu.memory_space<vmem>>, %arg7: memref<1x112xf32, #tpu.memory_space<vmem>>, %arg8: memref<16x12xf32, #tpu.memory_space<vmem>>, %arg9: memref<16x1xf32, #tpu.memory_space<vmem>>, %arg10: memref<192x192xf32, #tpu.memory_space<vmem>>, %arg11: memref<8x192xf32, #tpu.memory_space<vmem>>, %arg12: memref<8x192xf32, #tpu.memory_space<vmem>>, %arg13: memref<2x8x192xf32, #tpu.memory_space<vmem>>) attributes {dimension_semantics = [], scalar_prefetch = 0 : i64, scratch_operands = 0 : i64, tpu.core_type = #tpu.core_type<tc>} {
    %c0 = arith.constant 0 : index
    %c0_0 = arith.constant 0 : index
    %c0_1 = arith.constant 0 : index
    %0 = vector.load %arg0[%c0, %c0_0, %c0_1] : memref<2x4x256xf32, #tpu.memory_space<vmem>>, vector<1x4x256xf32>
    %1 = vector.shape_cast %0 : vector<1x4x256xf32> to vector<4x256xf32>
    %2 = vector.extract_strided_slice %1 {offsets = [0, 0], sizes = [4, 224], strides = [1, 1]} : vector<4x256xf32> to vector<4x224xf32>
    %3 = vector.extract_strided_slice %1 {offsets = [0, 16], sizes = [4, 224], strides = [1, 1]} : vector<4x256xf32> to vector<4x224xf32>
    %4 = vector.extract_strided_slice %1 {offsets = [0, 32], sizes = [4, 224], strides = [1, 1]} : vector<4x256xf32> to vector<4x224xf32>
    %5 = tpu.concatenate %2, %3, %4 in 0 : vector<4x224xf32>, vector<4x224xf32>, vector<4x224xf32> -> vector<12x224xf32>
    %c0_2 = arith.constant 0 : index
    %c0_3 = arith.constant 0 : index
    %6 = vector.load %arg1[%c0_2, %c0_3] : memref<16x12xf32, #tpu.memory_space<vmem>>, vector<16x12xf32>
    %cst = arith.constant dense<0.000000e+00> : vector<16x224xf32>
    %7 = tpu.matmul %6, %5, %cst {dimension_numbers = #tpu.dot_dimension_numbers<[1], [0], [0], [1], [0, 0, 1, 1], [], []>} : vector<16x12xf32>, vector<12x224xf32>, vector<16x224xf32> -> vector<16x224xf32>
    %c0_4 = arith.constant 0 : index
    %c0_5 = arith.constant 0 : index
    %8 = vector.load %arg2[%c0_4, %c0_5] : memref<16x1xf32, #tpu.memory_space<vmem>>, vector<16x1xf32>
    %9 = vector.broadcast %8 : vector<16x1xf32> to vector<16x224xf32>
    %10 = arith.addf %7, %9 : vector<16x224xf32>
    %11 = vector.extract_strided_slice %10 {offsets = [0, 0], sizes = [8, 224], strides = [1, 1]} : vector<16x224xf32> to vector<8x224xf32>
    %12 = vector.extract_strided_slice %10 {offsets = [8, 0], sizes = [8, 224], strides = [1, 1]} : vector<16x224xf32> to vector<8x224xf32>
    %13 = arith.negf %12 : vector<8x224xf32>
    %14 = math.exp %13 : vector<8x224xf32>
    %cst_6 = arith.constant 1.000000e+00 : f32
    %15 = vector.broadcast %cst_6 : f32 to vector<8x224xf32>
    %16 = arith.addf %15, %14 : vector<8x224xf32>
    %17 = arith.divf %15, %16 : vector<8x224xf32>
    %18 = arith.mulf %11, %17 : vector<8x224xf32>
    %c0_7 = arith.constant 0 : index
    %c0_8 = arith.constant 0 : index
    %19 = vector.load %arg3[%c0_7, %c0_8] : memref<4x8xf32, #tpu.memory_space<vmem>>, vector<4x8xf32>
    %cst_9 = arith.constant dense<0.000000e+00> : vector<4x224xf32>
    %20 = tpu.matmul %19, %18, %cst_9 {dimension_numbers = #tpu.dot_dimension_numbers<[1], [0], [0], [1], [0, 0, 1, 1], [], []>} : vector<4x8xf32>, vector<8x224xf32>, vector<4x224xf32> -> vector<4x224xf32>
    %c0_10 = arith.constant 0 : index
    %c0_11 = arith.constant 0 : index
    %21 = vector.load %arg4[%c0_10, %c0_11] : memref<4x1xf32, #tpu.memory_space<vmem>>, vector<4x1xf32>
    %22 = vector.broadcast %21 : vector<4x1xf32> to vector<4x224xf32>
    %23 = arith.addf %20, %22 : vector<4x224xf32>
    %c1 = arith.constant 1 : index
    %c0_12 = arith.constant 0 : index
    %c0_13 = arith.constant 0 : index
    %24 = vector.load %arg0[%c1, %c0_12, %c0_13] : memref<2x4x256xf32, #tpu.memory_space<vmem>>, vector<1x4x256xf32>
    %25 = vector.shape_cast %24 : vector<1x4x256xf32> to vector<4x256xf32>
    %26 = vector.extract_strided_slice %25 {offsets = [0, 0], sizes = [4, 224], strides = [1, 1]} : vector<4x256xf32> to vector<4x224xf32>
    %27 = vector.extract_strided_slice %25 {offsets = [0, 16], sizes = [4, 224], strides = [1, 1]} : vector<4x256xf32> to vector<4x224xf32>
    %28 = vector.extract_strided_slice %25 {offsets = [0, 32], sizes = [4, 224], strides = [1, 1]} : vector<4x256xf32> to vector<4x224xf32>
    %29 = tpu.concatenate %26, %27, %28 in 0 : vector<4x224xf32>, vector<4x224xf32>, vector<4x224xf32> -> vector<12x224xf32>
    %c0_14 = arith.constant 0 : index
    %c0_15 = arith.constant 0 : index
    %30 = vector.load %arg1[%c0_14, %c0_15] : memref<16x12xf32, #tpu.memory_space<vmem>>, vector<16x12xf32>
    %cst_16 = arith.constant dense<0.000000e+00> : vector<16x224xf32>
    %31 = tpu.matmul %30, %29, %cst_16 {dimension_numbers = #tpu.dot_dimension_numbers<[1], [0], [0], [1], [0, 0, 1, 1], [], []>} : vector<16x12xf32>, vector<12x224xf32>, vector<16x224xf32> -> vector<16x224xf32>
    %c0_17 = arith.constant 0 : index
    %c0_18 = arith.constant 0 : index
    %32 = vector.load %arg2[%c0_17, %c0_18] : memref<16x1xf32, #tpu.memory_space<vmem>>, vector<16x1xf32>
    %33 = vector.broadcast %32 : vector<16x1xf32> to vector<16x224xf32>
    %34 = arith.addf %31, %33 : vector<16x224xf32>
    %35 = vector.extract_strided_slice %34 {offsets = [0, 0], sizes = [8, 224], strides = [1, 1]} : vector<16x224xf32> to vector<8x224xf32>
    %36 = vector.extract_strided_slice %34 {offsets = [8, 0], sizes = [8, 224], strides = [1, 1]} : vector<16x224xf32> to vector<8x224xf32>
    %37 = arith.negf %36 : vector<8x224xf32>
    %38 = math.exp %37 : vector<8x224xf32>
    %cst_19 = arith.constant 1.000000e+00 : f32
    %39 = vector.broadcast %cst_19 : f32 to vector<8x224xf32>
    %40 = arith.addf %39, %38 : vector<8x224xf32>
    %41 = arith.divf %39, %40 : vector<8x224xf32>
    %42 = arith.mulf %35, %41 : vector<8x224xf32>
    %c0_20 = arith.constant 0 : index
    %c0_21 = arith.constant 0 : index
    %43 = vector.load %arg3[%c0_20, %c0_21] : memref<4x8xf32, #tpu.memory_space<vmem>>, vector<4x8xf32>
    %cst_22 = arith.constant dense<0.000000e+00> : vector<4x224xf32>
    %44 = tpu.matmul %43, %42, %cst_22 {dimension_numbers = #tpu.dot_dimension_numbers<[1], [0], [0], [1], [0, 0, 1, 1], [], []>} : vector<4x8xf32>, vector<8x224xf32>, vector<4x224xf32> -> vector<4x224xf32>
    %c0_23 = arith.constant 0 : index
    %c0_24 = arith.constant 0 : index
    %45 = vector.load %arg4[%c0_23, %c0_24] : memref<4x1xf32, #tpu.memory_space<vmem>>, vector<4x1xf32>
    %46 = vector.broadcast %45 : vector<4x1xf32> to vector<4x224xf32>
    %47 = arith.addf %44, %46 : vector<4x224xf32>
    %48 = vector.extract_strided_slice %23 {offsets = [0, 0], sizes = [1, 112], strides = [1, 1]} : vector<4x224xf32> to vector<1x112xf32>
    %49 = vector.extract_strided_slice %23 {offsets = [0, 112], sizes = [1, 112], strides = [1, 1]} : vector<4x224xf32> to vector<1x112xf32>
    %50 = vector.extract_strided_slice %23 {offsets = [1, 0], sizes = [1, 112], strides = [1, 1]} : vector<4x224xf32> to vector<1x112xf32>
    %51 = vector.extract_strided_slice %23 {offsets = [1, 112], sizes = [1, 112], strides = [1, 1]} : vector<4x224xf32> to vector<1x112xf32>
    %52 = vector.extract_strided_slice %23 {offsets = [2, 0], sizes = [1, 112], strides = [1, 1]} : vector<4x224xf32> to vector<1x112xf32>
    %53 = vector.extract_strided_slice %23 {offsets = [2, 112], sizes = [1, 112], strides = [1, 1]} : vector<4x224xf32> to vector<1x112xf32>
    %54 = vector.extract_strided_slice %23 {offsets = [3, 0], sizes = [1, 112], strides = [1, 1]} : vector<4x224xf32> to vector<1x112xf32>
    %55 = vector.extract_strided_slice %23 {offsets = [3, 112], sizes = [1, 112], strides = [1, 1]} : vector<4x224xf32> to vector<1x112xf32>
    %56 = vector.extract_strided_slice %47 {offsets = [0, 0], sizes = [1, 112], strides = [1, 1]} : vector<4x224xf32> to vector<1x112xf32>
    %57 = vector.extract_strided_slice %47 {offsets = [0, 112], sizes = [1, 112], strides = [1, 1]} : vector<4x224xf32> to vector<1x112xf32>
    %58 = vector.extract_strided_slice %47 {offsets = [1, 0], sizes = [1, 112], strides = [1, 1]} : vector<4x224xf32> to vector<1x112xf32>
    %59 = vector.extract_strided_slice %47 {offsets = [1, 112], sizes = [1, 112], strides = [1, 1]} : vector<4x224xf32> to vector<1x112xf32>
    %60 = vector.extract_strided_slice %47 {offsets = [2, 0], sizes = [1, 112], strides = [1, 1]} : vector<4x224xf32> to vector<1x112xf32>
    %61 = vector.extract_strided_slice %47 {offsets = [2, 112], sizes = [1, 112], strides = [1, 1]} : vector<4x224xf32> to vector<1x112xf32>
    %62 = vector.extract_strided_slice %47 {offsets = [3, 0], sizes = [1, 112], strides = [1, 1]} : vector<4x224xf32> to vector<1x112xf32>
    %63 = vector.extract_strided_slice %47 {offsets = [3, 112], sizes = [1, 112], strides = [1, 1]} : vector<4x224xf32> to vector<1x112xf32>
    %64 = tpu.concatenate %48, %49, %50, %51, %52, %53, %54, %55, %56, %57, %58, %59, %60, %61, %62, %63 in 0 : vector<1x112xf32>, vector<1x112xf32>, vector<1x112xf32>, vector<1x112xf32>, vector<1x112xf32>, vector<1x112xf32>, vector<1x112xf32>, vector<1x112xf32>, vector<1x112xf32>, vector<1x112xf32>, vector<1x112xf32>, vector<1x112xf32>, vector<1x112xf32>, vector<1x112xf32>, vector<1x112xf32>, vector<1x112xf32> -> vector<16x112xf32>
    %c0_25 = arith.constant 0 : index
    %c0_26 = arith.constant 0 : index
    %65 = vector.load %arg5[%c0_25, %c0_26] : memref<16x16xf32, #tpu.memory_space<vmem>>, vector<16x16xf32>
    %cst_27 = arith.constant dense<0.000000e+00> : vector<16x112xf32>
    %66 = tpu.matmul %65, %64, %cst_27 {dimension_numbers = #tpu.dot_dimension_numbers<[1], [0], [0], [1], [0, 0, 1, 1], [], []>} : vector<16x16xf32>, vector<16x112xf32>, vector<16x112xf32> -> vector<16x112xf32>
    %c0_28 = arith.constant 0 : index
    %c0_29 = arith.constant 0 : index
    %67 = vector.load %arg5[%c0_28, %c0_29] : memref<16x16xf32, #tpu.memory_space<vmem>>, vector<16x16xf32>
    %cst_30 = arith.constant dense<0.000000e+00> : vector<16x112xf32>
    %68 = tpu.matmul %67, %66, %cst_30 {dimension_numbers = #tpu.dot_dimension_numbers<[1], [0], [0], [1], [0, 0, 1, 1], [], []>} : vector<16x16xf32>, vector<16x112xf32>, vector<16x112xf32> -> vector<16x112xf32>
    %cst_31 = arith.constant 2.000000e+00 : f32
    %69 = vector.broadcast %cst_31 : f32 to vector<16x112xf32>
    %70 = arith.mulf %69, %68 : vector<16x112xf32>
    %71 = arith.subf %70, %64 : vector<16x112xf32>
    %72 = vector.extract_strided_slice %64 {offsets = [0, 0], sizes = [16, 16], strides = [1, 1]} : vector<16x112xf32> to vector<16x16xf32>
    %73 = vector.extract_strided_slice %66 {offsets = [0, 0], sizes = [16, 16], strides = [1, 1]} : vector<16x112xf32> to vector<16x16xf32>
    %74 = vector.extract_strided_slice %71 {offsets = [0, 0], sizes = [16, 16], strides = [1, 1]} : vector<16x112xf32> to vector<16x16xf32>
    %75 = tpu.concatenate %72, %73, %74 in 1 : vector<16x16xf32>, vector<16x16xf32>, vector<16x16xf32> -> vector<16x48xf32>
    %c0_32 = arith.constant 0 : index
    %c0_33 = arith.constant 0 : index
    %76 = vector.load %arg6[%c0_32, %c0_33] : memref<48x16xf32, #tpu.memory_space<vmem>>, vector<48x16xf32>
    %cst_34 = arith.constant dense<0.000000e+00> : vector<16x16xf32>
    %77 = tpu.matmul %75, %76, %cst_34 {dimension_numbers = #tpu.dot_dimension_numbers<[1], [0], [0], [1], [0, 0, 1, 1], [], []>} : vector<16x48xf32>, vector<48x16xf32>, vector<16x16xf32> -> vector<16x16xf32>
    %78 = vector.extract_strided_slice %64 {offsets = [0, 16], sizes = [16, 16], strides = [1, 1]} : vector<16x112xf32> to vector<16x16xf32>
    %79 = vector.extract_strided_slice %66 {offsets = [0, 16], sizes = [16, 16], strides = [1, 1]} : vector<16x112xf32> to vector<16x16xf32>
    %80 = vector.extract_strided_slice %71 {offsets = [0, 16], sizes = [16, 16], strides = [1, 1]} : vector<16x112xf32> to vector<16x16xf32>
    %81 = tpu.concatenate %78, %79, %80 in 1 : vector<16x16xf32>, vector<16x16xf32>, vector<16x16xf32> -> vector<16x48xf32>
    %c0_35 = arith.constant 0 : index
    %c0_36 = arith.constant 0 : index
    %82 = vector.load %arg6[%c0_35, %c0_36] : memref<48x16xf32, #tpu.memory_space<vmem>>, vector<48x16xf32>
    %cst_37 = arith.constant dense<0.000000e+00> : vector<16x16xf32>
    %83 = tpu.matmul %81, %82, %cst_37 {dimension_numbers = #tpu.dot_dimension_numbers<[1], [0], [0], [1], [0, 0, 1, 1], [], []>} : vector<16x48xf32>, vector<48x16xf32>, vector<16x16xf32> -> vector<16x16xf32>
    %84 = vector.extract_strided_slice %64 {offsets = [0, 32], sizes = [16, 16], strides = [1, 1]} : vector<16x112xf32> to vector<16x16xf32>
    %85 = vector.extract_strided_slice %66 {offsets = [0, 32], sizes = [16, 16], strides = [1, 1]} : vector<16x112xf32> to vector<16x16xf32>
    %86 = vector.extract_strided_slice %71 {offsets = [0, 32], sizes = [16, 16], strides = [1, 1]} : vector<16x112xf32> to vector<16x16xf32>
    %87 = tpu.concatenate %84, %85, %86 in 1 : vector<16x16xf32>, vector<16x16xf32>, vector<16x16xf32> -> vector<16x48xf32>
    %c0_38 = arith.constant 0 : index
    %c0_39 = arith.constant 0 : index
    %88 = vector.load %arg6[%c0_38, %c0_39] : memref<48x16xf32, #tpu.memory_space<vmem>>, vector<48x16xf32>
    %cst_40 = arith.constant dense<0.000000e+00> : vector<16x16xf32>
    %89 = tpu.matmul %87, %88, %cst_40 {dimension_numbers = #tpu.dot_dimension_numbers<[1], [0], [0], [1], [0, 0, 1, 1], [], []>} : vector<16x48xf32>, vector<48x16xf32>, vector<16x16xf32> -> vector<16x16xf32>
    %90 = vector.extract_strided_slice %64 {offsets = [0, 48], sizes = [16, 16], strides = [1, 1]} : vector<16x112xf32> to vector<16x16xf32>
    %91 = vector.extract_strided_slice %66 {offsets = [0, 48], sizes = [16, 16], strides = [1, 1]} : vector<16x112xf32> to vector<16x16xf32>
    %92 = vector.extract_strided_slice %71 {offsets = [0, 48], sizes = [16, 16], strides = [1, 1]} : vector<16x112xf32> to vector<16x16xf32>
    %93 = tpu.concatenate %90, %91, %92 in 1 : vector<16x16xf32>, vector<16x16xf32>, vector<16x16xf32> -> vector<16x48xf32>
    %c0_41 = arith.constant 0 : index
    %c0_42 = arith.constant 0 : index
    %94 = vector.load %arg6[%c0_41, %c0_42] : memref<48x16xf32, #tpu.memory_space<vmem>>, vector<48x16xf32>
    %cst_43 = arith.constant dense<0.000000e+00> : vector<16x16xf32>
    %95 = tpu.matmul %93, %94, %cst_43 {dimension_numbers = #tpu.dot_dimension_numbers<[1], [0], [0], [1], [0, 0, 1, 1], [], []>} : vector<16x48xf32>, vector<48x16xf32>, vector<16x16xf32> -> vector<16x16xf32>
    %96 = vector.extract_strided_slice %64 {offsets = [0, 64], sizes = [16, 16], strides = [1, 1]} : vector<16x112xf32> to vector<16x16xf32>
    %97 = vector.extract_strided_slice %66 {offsets = [0, 64], sizes = [16, 16], strides = [1, 1]} : vector<16x112xf32> to vector<16x16xf32>
    %98 = vector.extract_strided_slice %71 {offsets = [0, 64], sizes = [16, 16], strides = [1, 1]} : vector<16x112xf32> to vector<16x16xf32>
    %99 = tpu.concatenate %96, %97, %98 in 1 : vector<16x16xf32>, vector<16x16xf32>, vector<16x16xf32> -> vector<16x48xf32>
    %c0_44 = arith.constant 0 : index
    %c0_45 = arith.constant 0 : index
    %100 = vector.load %arg6[%c0_44, %c0_45] : memref<48x16xf32, #tpu.memory_space<vmem>>, vector<48x16xf32>
    %cst_46 = arith.constant dense<0.000000e+00> : vector<16x16xf32>
    %101 = tpu.matmul %99, %100, %cst_46 {dimension_numbers = #tpu.dot_dimension_numbers<[1], [0], [0], [1], [0, 0, 1, 1], [], []>} : vector<16x48xf32>, vector<48x16xf32>, vector<16x16xf32> -> vector<16x16xf32>
    %102 = vector.extract_strided_slice %64 {offsets = [0, 80], sizes = [16, 16], strides = [1, 1]} : vector<16x112xf32> to vector<16x16xf32>
    %103 = vector.extract_strided_slice %66 {offsets = [0, 80], sizes = [16, 16], strides = [1, 1]} : vector<16x112xf32> to vector<16x16xf32>
    %104 = vector.extract_strided_slice %71 {offsets = [0, 80], sizes = [16, 16], strides = [1, 1]} : vector<16x112xf32> to vector<16x16xf32>
    %105 = tpu.concatenate %102, %103, %104 in 1 : vector<16x16xf32>, vector<16x16xf32>, vector<16x16xf32> -> vector<16x48xf32>
    %c0_47 = arith.constant 0 : index
    %c0_48 = arith.constant 0 : index
    %106 = vector.load %arg6[%c0_47, %c0_48] : memref<48x16xf32, #tpu.memory_space<vmem>>, vector<48x16xf32>
    %cst_49 = arith.constant dense<0.000000e+00> : vector<16x16xf32>
    %107 = tpu.matmul %105, %106, %cst_49 {dimension_numbers = #tpu.dot_dimension_numbers<[1], [0], [0], [1], [0, 0, 1, 1], [], []>} : vector<16x48xf32>, vector<48x16xf32>, vector<16x16xf32> -> vector<16x16xf32>
    %108 = vector.extract_strided_slice %64 {offsets = [0, 96], sizes = [16, 16], strides = [1, 1]} : vector<16x112xf32> to vector<16x16xf32>
    %109 = vector.extract_strided_slice %66 {offsets = [0, 96], sizes = [16, 16], strides = [1, 1]} : vector<16x112xf32> to vector<16x16xf32>
    %110 = vector.extract_strided_slice %71 {offsets = [0, 96], sizes = [16, 16], strides = [1, 1]} : vector<16x112xf32> to vector<16x16xf32>
    %111 = tpu.concatenate %108, %109, %110 in 1 : vector<16x16xf32>, vector<16x16xf32>, vector<16x16xf32> -> vector<16x48xf32>
    %c0_50 = arith.constant 0 : index
    %c0_51 = arith.constant 0 : index
    %112 = vector.load %arg6[%c0_50, %c0_51] : memref<48x16xf32, #tpu.memory_space<vmem>>, vector<48x16xf32>
    %cst_52 = arith.constant dense<0.000000e+00> : vector<16x16xf32>
    %113 = tpu.matmul %111, %112, %cst_52 {dimension_numbers = #tpu.dot_dimension_numbers<[1], [0], [0], [1], [0, 0, 1, 1], [], []>} : vector<16x48xf32>, vector<48x16xf32>, vector<16x16xf32> -> vector<16x16xf32>
    %114 = tpu.concatenate %77, %83, %89, %95, %101, %107, %113 in 1 : vector<16x16xf32>, vector<16x16xf32>, vector<16x16xf32>, vector<16x16xf32>, vector<16x16xf32>, vector<16x16xf32>, vector<16x16xf32> -> vector<16x112xf32>
    %c0_53 = arith.constant 0 : index
    %c0_54 = arith.constant 0 : index
    %115 = vector.load %arg7[%c0_53, %c0_54] : memref<1x112xf32, #tpu.memory_space<vmem>>, vector<1x112xf32>
    %116 = vector.broadcast %115 : vector<1x112xf32> to vector<16x112xf32>
    %117 = arith.addf %114, %116 : vector<16x112xf32>
    %118 = arith.addf %117, %64 : vector<16x112xf32>
    %cst_55 = arith.constant 0.000000e+00 : f32
    %119 = vector.broadcast %cst_55 : f32 to vector<16x112xf32>
    %120 = arith.maximumf %118, %119 : vector<16x112xf32>
    %121 = vector.extract_strided_slice %120 {offsets = [0, 0], sizes = [1, 112], strides = [1, 1]} : vector<16x112xf32> to vector<1x112xf32>
    %122 = vector.extract_strided_slice %120 {offsets = [1, 0], sizes = [1, 112], strides = [1, 1]} : vector<16x112xf32> to vector<1x112xf32>
    %123 = tpu.concatenate %121, %122 in 1 : vector<1x112xf32>, vector<1x112xf32> -> vector<1x224xf32>
    %124 = vector.extract_strided_slice %120 {offsets = [2, 0], sizes = [1, 112], strides = [1, 1]} : vector<16x112xf32> to vector<1x112xf32>
    %125 = vector.extract_strided_slice %120 {offsets = [3, 0], sizes = [1, 112], strides = [1, 1]} : vector<16x112xf32> to vector<1x112xf32>
    %126 = tpu.concatenate %124, %125 in 1 : vector<1x112xf32>, vector<1x112xf32> -> vector<1x224xf32>
    %127 = vector.extract_strided_slice %120 {offsets = [4, 0], sizes = [1, 112], strides = [1, 1]} : vector<16x112xf32> to vector<1x112xf32>
    %128 = vector.extract_strided_slice %120 {offsets = [5, 0], sizes = [1, 112], strides = [1, 1]} : vector<16x112xf32> to vector<1x112xf32>
    %129 = tpu.concatenate %127, %128 in 1 : vector<1x112xf32>, vector<1x112xf32> -> vector<1x224xf32>
    %130 = vector.extract_strided_slice %120 {offsets = [6, 0], sizes = [1, 112], strides = [1, 1]} : vector<16x112xf32> to vector<1x112xf32>
    %131 = vector.extract_strided_slice %120 {offsets = [7, 0], sizes = [1, 112], strides = [1, 1]} : vector<16x112xf32> to vector<1x112xf32>
    %132 = tpu.concatenate %130, %131 in 1 : vector<1x112xf32>, vector<1x112xf32> -> vector<1x224xf32>
    %133 = tpu.concatenate %123, %126, %129, %132 in 0 : vector<1x224xf32>, vector<1x224xf32>, vector<1x224xf32>, vector<1x224xf32> -> vector<4x224xf32>
    %134 = vector.extract_strided_slice %133 {offsets = [0, 0], sizes = [4, 192], strides = [1, 1]} : vector<4x224xf32> to vector<4x192xf32>
    %135 = vector.extract_strided_slice %133 {offsets = [0, 16], sizes = [4, 192], strides = [1, 1]} : vector<4x224xf32> to vector<4x192xf32>
    %136 = vector.extract_strided_slice %133 {offsets = [0, 32], sizes = [4, 192], strides = [1, 1]} : vector<4x224xf32> to vector<4x192xf32>
    %137 = tpu.concatenate %134, %135, %136 in 0 : vector<4x192xf32>, vector<4x192xf32>, vector<4x192xf32> -> vector<12x192xf32>
    %c0_56 = arith.constant 0 : index
    %c0_57 = arith.constant 0 : index
    %138 = vector.load %arg8[%c0_56, %c0_57] : memref<16x12xf32, #tpu.memory_space<vmem>>, vector<16x12xf32>
    %cst_58 = arith.constant dense<0.000000e+00> : vector<16x192xf32>
    %139 = tpu.matmul %138, %137, %cst_58 {dimension_numbers = #tpu.dot_dimension_numbers<[1], [0], [0], [1], [0, 0, 1, 1], [], []>} : vector<16x12xf32>, vector<12x192xf32>, vector<16x192xf32> -> vector<16x192xf32>
    %c0_59 = arith.constant 0 : index
    %c0_60 = arith.constant 0 : index
    %140 = vector.load %arg9[%c0_59, %c0_60] : memref<16x1xf32, #tpu.memory_space<vmem>>, vector<16x1xf32>
    %141 = vector.broadcast %140 : vector<16x1xf32> to vector<16x192xf32>
    %142 = arith.addf %139, %141 : vector<16x192xf32>
    %143 = vector.extract_strided_slice %142 {offsets = [0, 0], sizes = [8, 192], strides = [1, 1]} : vector<16x192xf32> to vector<8x192xf32>
    %144 = vector.extract_strided_slice %142 {offsets = [8, 0], sizes = [8, 192], strides = [1, 1]} : vector<16x192xf32> to vector<8x192xf32>
    %145 = arith.negf %144 : vector<8x192xf32>
    %146 = math.exp %145 : vector<8x192xf32>
    %cst_61 = arith.constant 1.000000e+00 : f32
    %147 = vector.broadcast %cst_61 : f32 to vector<8x192xf32>
    %148 = arith.addf %147, %146 : vector<8x192xf32>
    %149 = arith.divf %147, %148 : vector<8x192xf32>
    %150 = arith.mulf %143, %149 : vector<8x192xf32>
    %cst_62 = arith.constant dense<0.000000e+00> : vector<192xf32>
    %151 = vector.multi_reduction <add>, %150, %cst_62 [0] : vector<8x192xf32> to vector<192xf32>
    %152 = vector.shape_cast %151 : vector<192xf32> to vector<1x192xf32>
    %153 = arith.mulf %150, %150 : vector<8x192xf32>
    %cst_63 = arith.constant dense<0.000000e+00> : vector<192xf32>
    %154 = vector.multi_reduction <add>, %153, %cst_63 [0] : vector<8x192xf32> to vector<192xf32>
    %155 = vector.shape_cast %154 : vector<192xf32> to vector<1x192xf32>
    %c0_64 = arith.constant 0 : index
    %c0_65 = arith.constant 0 : index
    %156 = vector.load %arg10[%c0_64, %c0_65] : memref<192x192xf32, #tpu.memory_space<vmem>>, vector<192x192xf32>
    %cst_66 = arith.constant dense<0.000000e+00> : vector<1x192xf32>
    %157 = tpu.matmul %152, %156, %cst_66 {dimension_numbers = #tpu.dot_dimension_numbers<[1], [0], [0], [1], [0, 0, 1, 1], [], []>} : vector<1x192xf32>, vector<192x192xf32>, vector<1x192xf32> -> vector<1x192xf32>
    %c0_67 = arith.constant 0 : index
    %c0_68 = arith.constant 0 : index
    %158 = vector.load %arg10[%c0_67, %c0_68] : memref<192x192xf32, #tpu.memory_space<vmem>>, vector<192x192xf32>
    %cst_69 = arith.constant dense<0.000000e+00> : vector<1x192xf32>
    %159 = tpu.matmul %155, %158, %cst_69 {dimension_numbers = #tpu.dot_dimension_numbers<[1], [0], [0], [1], [0, 0, 1, 1], [], []>} : vector<1x192xf32>, vector<192x192xf32>, vector<1x192xf32> -> vector<1x192xf32>
    %160 = arith.mulf %157, %157 : vector<1x192xf32>
    %161 = arith.subf %159, %160 : vector<1x192xf32>
    %162 = vector.broadcast %157 : vector<1x192xf32> to vector<8x192xf32>
    %163 = arith.subf %150, %162 : vector<8x192xf32>
    %cst_70 = arith.constant 9.99999974E-6 : f32
    %164 = vector.broadcast %cst_70 : f32 to vector<1x192xf32>
    %165 = arith.addf %161, %164 : vector<1x192xf32>
    %166 = math.rsqrt %165 : vector<1x192xf32>
    %167 = vector.broadcast %166 : vector<1x192xf32> to vector<8x192xf32>
    %168 = arith.mulf %163, %167 : vector<8x192xf32>
    %c0_71 = arith.constant 0 : index
    %c0_72 = arith.constant 0 : index
    %169 = vector.load %arg11[%c0_71, %c0_72] : memref<8x192xf32, #tpu.memory_space<vmem>>, vector<8x192xf32>
    %170 = arith.mulf %168, %169 : vector<8x192xf32>
    %c0_73 = arith.constant 0 : index
    %c0_74 = arith.constant 0 : index
    %171 = vector.load %arg12[%c0_73, %c0_74] : memref<8x192xf32, #tpu.memory_space<vmem>>, vector<8x192xf32>
    %172 = arith.addf %170, %171 : vector<8x192xf32>
    %c0_75 = arith.constant 0 : index
    %c0_76 = arith.constant 0 : index
    %c0_77 = arith.constant 0 : index
    %173 = vector.load %arg13[%c0_75, %c0_76, %c0_77] : memref<2x8x192xf32, #tpu.memory_space<vmem>>, vector<1x8x192xf32>
    %174 = vector.shape_cast %173 : vector<1x8x192xf32> to vector<8x192xf32>
    %175 = vector.shape_cast %172 : vector<8x192xf32> to vector<1x8x192xf32>
    tpu.vector_store %arg13[%c0_75, %c0_76, %c0_77], %175 {strides = array<i32>} : memref<2x8x192xf32, #tpu.memory_space<vmem>>, vector<1x8x192xf32>,
    %176 = vector.extract_strided_slice %120 {offsets = [8, 0], sizes = [1, 112], strides = [1, 1]} : vector<16x112xf32> to vector<1x112xf32>
    %177 = vector.extract_strided_slice %120 {offsets = [9, 0], sizes = [1, 112], strides = [1, 1]} : vector<16x112xf32> to vector<1x112xf32>
    %178 = tpu.concatenate %176, %177 in 1 : vector<1x112xf32>, vector<1x112xf32> -> vector<1x224xf32>
    %179 = vector.extract_strided_slice %120 {offsets = [10, 0], sizes = [1, 112], strides = [1, 1]} : vector<16x112xf32> to vector<1x112xf32>
    %180 = vector.extract_strided_slice %120 {offsets = [11, 0], sizes = [1, 112], strides = [1, 1]} : vector<16x112xf32> to vector<1x112xf32>
    %181 = tpu.concatenate %179, %180 in 1 : vector<1x112xf32>, vector<1x112xf32> -> vector<1x224xf32>
    %182 = vector.extract_strided_slice %120 {offsets = [12, 0], sizes = [1, 112], strides = [1, 1]} : vector<16x112xf32> to vector<1x112xf32>
    %183 = vector.extract_strided_slice %120 {offsets = [13, 0], sizes = [1, 112], strides = [1, 1]} : vector<16x112xf32> to vector<1x112xf32>
    %184 = tpu.concatenate %182, %183 in 1 : vector<1x112xf32>, vector<1x112xf32> -> vector<1x224xf32>
    %185 = vector.extract_strided_slice %120 {offsets = [14, 0], sizes = [1, 112], strides = [1, 1]} : vector<16x112xf32> to vector<1x112xf32>
    %186 = vector.extract_strided_slice %120 {offsets = [15, 0], sizes = [1, 112], strides = [1, 1]} : vector<16x112xf32> to vector<1x112xf32>
    %187 = tpu.concatenate %185, %186 in 1 : vector<1x112xf32>, vector<1x112xf32> -> vector<1x224xf32>
    %188 = tpu.concatenate %178, %181, %184, %187 in 0 : vector<1x224xf32>, vector<1x224xf32>, vector<1x224xf32>, vector<1x224xf32> -> vector<4x224xf32>
    %189 = vector.extract_strided_slice %188 {offsets = [0, 0], sizes = [4, 192], strides = [1, 1]} : vector<4x224xf32> to vector<4x192xf32>
    %190 = vector.extract_strided_slice %188 {offsets = [0, 16], sizes = [4, 192], strides = [1, 1]} : vector<4x224xf32> to vector<4x192xf32>
    %191 = vector.extract_strided_slice %188 {offsets = [0, 32], sizes = [4, 192], strides = [1, 1]} : vector<4x224xf32> to vector<4x192xf32>
    %192 = tpu.concatenate %189, %190, %191 in 0 : vector<4x192xf32>, vector<4x192xf32>, vector<4x192xf32> -> vector<12x192xf32>
    %c0_78 = arith.constant 0 : index
    %c0_79 = arith.constant 0 : index
    %193 = vector.load %arg8[%c0_78, %c0_79] : memref<16x12xf32, #tpu.memory_space<vmem>>, vector<16x12xf32>
    %cst_80 = arith.constant dense<0.000000e+00> : vector<16x192xf32>
    %194 = tpu.matmul %193, %192, %cst_80 {dimension_numbers = #tpu.dot_dimension_numbers<[1], [0], [0], [1], [0, 0, 1, 1], [], []>} : vector<16x12xf32>, vector<12x192xf32>, vector<16x192xf32> -> vector<16x192xf32>
    %c0_81 = arith.constant 0 : index
    %c0_82 = arith.constant 0 : index
    %195 = vector.load %arg9[%c0_81, %c0_82] : memref<16x1xf32, #tpu.memory_space<vmem>>, vector<16x1xf32>
    %196 = vector.broadcast %195 : vector<16x1xf32> to vector<16x192xf32>
    %197 = arith.addf %194, %196 : vector<16x192xf32>
    %198 = vector.extract_strided_slice %197 {offsets = [0, 0], sizes = [8, 192], strides = [1, 1]} : vector<16x192xf32> to vector<8x192xf32>
    %199 = vector.extract_strided_slice %197 {offsets = [8, 0], sizes = [8, 192], strides = [1, 1]} : vector<16x192xf32> to vector<8x192xf32>
    %200 = arith.negf %199 : vector<8x192xf32>
    %201 = math.exp %200 : vector<8x192xf32>
    %cst_83 = arith.constant 1.000000e+00 : f32
    %202 = vector.broadcast %cst_83 : f32 to vector<8x192xf32>
    %203 = arith.addf %202, %201 : vector<8x192xf32>
    %204 = arith.divf %202, %203 : vector<8x192xf32>
    %205 = arith.mulf %198, %204 : vector<8x192xf32>
    %cst_84 = arith.constant dense<0.000000e+00> : vector<192xf32>
    %206 = vector.multi_reduction <add>, %205, %cst_84 [0] : vector<8x192xf32> to vector<192xf32>
    %207 = vector.shape_cast %206 : vector<192xf32> to vector<1x192xf32>
    %208 = arith.mulf %205, %205 : vector<8x192xf32>
    %cst_85 = arith.constant dense<0.000000e+00> : vector<192xf32>
    %209 = vector.multi_reduction <add>, %208, %cst_85 [0] : vector<8x192xf32> to vector<192xf32>
    %210 = vector.shape_cast %209 : vector<192xf32> to vector<1x192xf32>
    %c0_86 = arith.constant 0 : index
    %c0_87 = arith.constant 0 : index
    %211 = vector.load %arg10[%c0_86, %c0_87] : memref<192x192xf32, #tpu.memory_space<vmem>>, vector<192x192xf32>
    %cst_88 = arith.constant dense<0.000000e+00> : vector<1x192xf32>
    %212 = tpu.matmul %207, %211, %cst_88 {dimension_numbers = #tpu.dot_dimension_numbers<[1], [0], [0], [1], [0, 0, 1, 1], [], []>} : vector<1x192xf32>, vector<192x192xf32>, vector<1x192xf32> -> vector<1x192xf32>
    %c0_89 = arith.constant 0 : index
    %c0_90 = arith.constant 0 : index
    %213 = vector.load %arg10[%c0_89, %c0_90] : memref<192x192xf32, #tpu.memory_space<vmem>>, vector<192x192xf32>
    %cst_91 = arith.constant dense<0.000000e+00> : vector<1x192xf32>
    %214 = tpu.matmul %210, %213, %cst_91 {dimension_numbers = #tpu.dot_dimension_numbers<[1], [0], [0], [1], [0, 0, 1, 1], [], []>} : vector<1x192xf32>, vector<192x192xf32>, vector<1x192xf32> -> vector<1x192xf32>
    %215 = arith.mulf %212, %212 : vector<1x192xf32>
    %216 = arith.subf %214, %215 : vector<1x192xf32>
    %217 = vector.broadcast %212 : vector<1x192xf32> to vector<8x192xf32>
    %218 = arith.subf %205, %217 : vector<8x192xf32>
    %cst_92 = arith.constant 9.99999974E-6 : f32
    %219 = vector.broadcast %cst_92 : f32 to vector<1x192xf32>
    %220 = arith.addf %216, %219 : vector<1x192xf32>
    %221 = math.rsqrt %220 : vector<1x192xf32>
    %222 = vector.broadcast %221 : vector<1x192xf32> to vector<8x192xf32>
    %223 = arith.mulf %218, %222 : vector<8x192xf32>
    %c0_93 = arith.constant 0 : index
    %c0_94 = arith.constant 0 : index
    %224 = vector.load %arg11[%c0_93, %c0_94] : memref<8x192xf32, #tpu.memory_space<vmem>>, vector<8x192xf32>
    %225 = arith.mulf %223, %224 : vector<8x192xf32>
    %c0_95 = arith.constant 0 : index
    %c0_96 = arith.constant 0 : index
    %226 = vector.load %arg12[%c0_95, %c0_96] : memref<8x192xf32, #tpu.memory_space<vmem>>, vector<8x192xf32>
    %227 = arith.addf %225, %226 : vector<8x192xf32>
    %c1_97 = arith.constant 1 : index
    %c0_98 = arith.constant 0 : index
    %c0_99 = arith.constant 0 : index
    %228 = vector.load %arg13[%c1_97, %c0_98, %c0_99] : memref<2x8x192xf32, #tpu.memory_space<vmem>>, vector<1x8x192xf32>
    %229 = vector.shape_cast %228 : vector<1x8x192xf32> to vector<8x192xf32>
    %230 = vector.shape_cast %227 : vector<8x192xf32> to vector<1x8x192xf32>
    tpu.vector_store %arg13[%c1_97, %c0_98, %c0_99], %230 {strides = array<i32>} : memref<2x8x192xf32, #tpu.memory_space<vmem>>, vector<1x8x192xf32>,
    return
  }
}

</mosaic_0001>

<llo_original>
// kernel: forward.1
$region0: #{forward.1}
  #allocation0 [shape = 'u32[]', space=smem, size = 0x4, offset = 0x4, fixed_abs, tag = 'smem constant byte address 0x4 - core index']
  #allocation1 [shape = 'u32[144,128]{1,0:T(1,128)}', space=vmem, size = 0x12000, scoped, tag = 'internal scratch']
  %s0 = inlined_call_operand.vmem [shape: f32[2,4,256], index: 0, kind: input, shape index: {}]
  %s1 = inlined_call_operand.vmem [shape: f32[16,12], index: 1, kind: input, shape index: {}]
  %s2 = inlined_call_operand.vmem [shape: f32[16,1], index: 2, kind: input, shape index: {}]
  %s3 = inlined_call_operand.vmem [shape: f32[4,8], index: 3, kind: input, shape index: {}]
  %s4 = inlined_call_operand.vmem [shape: f32[4,1], index: 4, kind: input, shape index: {}]
  %s5 = inlined_call_operand.vmem [shape: f32[16,16], index: 5, kind: input, shape index: {}]
  %s6 = inlined_call_operand.vmem [shape: f32[48,16], index: 6, kind: input, shape index: {}]
  %s7 = inlined_call_operand.vmem [shape: f32[1,112], index: 7, kind: input, shape index: {}]
  %s8 = inlined_call_operand.vmem [shape: f32[16,12], index: 8, kind: input, shape index: {}]
  %s9 = inlined_call_operand.vmem [shape: f32[16,1], index: 9, kind: input, shape index: {}]
  %s10 = inlined_call_operand.hbm [shape: f32[192,192], index: 10, kind: input, shape index: {}]
  %s11 = inlined_call_operand.vmem [shape: f32[8,192], index: 11, kind: input, shape index: {}]
  %s12 = inlined_call_operand.vmem [shape: f32[8,192], index: 12, kind: input, shape index: {}]
  %s13 = inlined_call_operand.vmem [shape: f32[2,8,192], index: 13, kind: output, shape index: {}]
  %s14 = sld [smem:[#allocation0]]
  $region66: #{forward.1} parent=0
    _
  %s16 = ssub.s32 1, %s14
  %s17 = scalar_select 0, %s16, %s14
  $region1: #{forward.1} parent=0
    #allocation2 [shape = 'u8[196608]{0}', space=vmem, size = 0x30000, scoped, tag = 'input window, operand 10, single buffered']
    #allocation3 [shape = 's32[1]{0}', space=sflag, size = 0x4, scoped, tag = 'scoped memory for forward.1']
    %18 = vsyncpa [#allocation3], 0
    // Predicated region
    $region2: #{forward.1} parent=1 // pred_check
      _
    $region3: #{forward.1} parent=1 // pred_check_branch
      %20 = sbr.rel (0) target = $region5
    $region4: #{forward.1} parent=1 // pred_region
      _
    $region5: #{forward.1} parent=1 // pred_fallthru
      _
    // Predicated region
    $region6: #{forward.1} parent=1 // pred_check
      _
    $region7: #{forward.1} parent=1 // pred_check_branch
      %22 = sbr.rel (0) target = $region9
    $region8: #{forward.1} parent=1 // pred_region
      _
    $region9: #{forward.1} parent=1 // pred_fallthru
      _
    // Predicated region
    $region10: #{forward.1} parent=1 // pred_check
      _
    $region11: #{forward.1} parent=1 // pred_check_branch
      %24 = sbr.rel (0) target = $region13
    $region12: #{forward.1} parent=1 // pred_region
      _
    $region13: #{forward.1} parent=1 // pred_fallthru
      _
    // Predicated region
    $region14: #{forward.1} parent=1 // pred_check
      _
    $region15: #{forward.1} parent=1 // pred_check_branch
      %26 = sbr.rel (0) target = $region17
    $region16: #{forward.1} parent=1 // pred_region
      _
    $region17: #{forward.1} parent=1 // pred_fallthru
      _
    // Predicated region
    $region18: #{forward.1} parent=1 // pred_check
      _
    $region19: #{forward.1} parent=1 // pred_check_branch
      %28 = sbr.rel (0) target = $region21
    $region20: #{forward.1} parent=1 // pred_region
      _
    $region21: #{forward.1} parent=1 // pred_fallthru
      _
    // Predicated region
    $region22: #{forward.1} parent=1 // pred_check
      _
    $region23: #{forward.1} parent=1 // pred_check_branch
      %30 = sbr.rel (0) target = $region25
    $region24: #{forward.1} parent=1 // pred_region
      _
    $region25: #{forward.1} parent=1 // pred_fallthru
      _
    // Predicated region
    $region26: #{forward.1} parent=1 // pred_check
      _
    $region27: #{forward.1} parent=1 // pred_check_branch
      %32 = sbr.rel (0) target = $region29
    $region28: #{forward.1} parent=1 // pred_region
      _
    $region29: #{forward.1} parent=1 // pred_fallthru
      _
    // Predicated region
    $region30: #{forward.1} parent=1 // pred_check
      _
    $region31: #{forward.1} parent=1 // pred_check_branch
      %34 = sbr.rel (0) target = $region33
    $region32: #{forward.1} parent=1 // pred_region
      _
    $region33: #{forward.1} parent=1 // pred_fallthru
      _
    // Predicated region
    $region34: #{forward.1} parent=1 // pred_check
      _
    $region35: #{forward.1} parent=1 // pred_check_branch
      %36 = sbr.rel (0) target = $region37
    $region36: #{forward.1} parent=1 // pred_region
      _
    $region37: #{forward.1} parent=1 // pred_fallthru
      _
    // Predicated region
    $region38: #{forward.1} parent=1 // pred_check
      _
    $region39: #{forward.1} parent=1 // pred_check_branch
      %38 = sbr.rel (0) target = $region41
    $region40: #{forward.1} parent=1 // pred_region
      _
    $region41: #{forward.1} parent=1 // pred_fallthru
      _
    // Predicated region
    $region42: #{forward.1} parent=1 // pred_check
      _
    $region43: #{forward.1} parent=1 // pred_check_branch
      %40 = sbr.rel (0) target = $region45
    $region44: #{forward.1} parent=1 // pred_region
      %s42 = ssub.s32 6144, 6144
      %43 = vsyncadd [#allocation3], %s42
      %s44 = sshll.u32 [#allocation2], 4
      %s45 = int_to_ptr.vmem [resolvable:$true] %s44
      %50 = dma.hbm_to_vmem [thread:$0]  %s10, 6144, %s45, [#allocation3], 256, 256, 16
    $region45: #{forward.1} parent=1 // pred_fallthru
      _
    // Predicated region
    $region46: #{forward.1} parent=1 // pred_check
      _
    $region47: #{forward.1} parent=1 // pred_check_branch
      %52 = sbr.rel (0) target = $region49
    $region48: #{forward.1} parent=1 // pred_region
      _
    $region49: #{forward.1} parent=1 // pred_fallthru
      _
    // Predicated region
    $region50: #{forward.1} parent=1 // pred_check
      _
    $region51: #{forward.1} parent=1 // pred_check_branch
      %54 = sbr.rel (0) target = $region53
    $region52: #{forward.1} parent=1 // pred_region
      _
    $region53: #{forward.1} parent=1 // pred_fallthru
      _
    // Predicated region
    $region54: #{forward.1} parent=1 // pred_check
      _
    $region55: #{forward.1} parent=1 // pred_check_branch
      %56 = sbr.rel (0) target = $region57
    $region56: #{forward.1} parent=1 // pred_region
      %57 = dma.done [#allocation3], 6144
    $region57: #{forward.1} parent=1 // pred_fallthru
      _
    %v58 = vld [vmem:[%s0] sm:$0xff]
    %v60 = vcombine.high %v58, %v58
    %v62 = vcombine.low %v58, %v58
    %63 = vrot.lane.b32.xlu0 %v62, 112
    %v64 = vpop.permute.xlu0 %63
    %65 = vrot.lane.b32.xlu0 %v58, 112
    %v66 = vpop.permute.xlu0 %65
    %vm67 = vcmask 916480
    %v68 = vsel %vm67, %v64, %v66
    %71 = vrot.lane.b32.xlu0 %v58, 96
    %v72 = vpop.permute.xlu0 %71
    %73 = vrot.lane.b32.xlu0 %v60, 96
    %v74 = vpop.permute.xlu0 %73
    %vm75 = vcmask 785408
    %v76 = vsel %vm75, %v72, %v74
    %vm77 = vcmask 1043456
    %v78 = vsel %vm77, %v58, %v68
    %v79 = vsel %vm77, %v60, %v66
    %v80 = vld [vmem:[%s1] sm:$0xff]
    %v81 = vld [vmem:[%s1 + $0x8] sm:$0xff]
    %v82 = vld [vmem:[%s2] sm:$0xff]
    %v83 = vld [vmem:[%s2 + $0x8] sm:$0xff]
    %85 = vset.pattern.permute.xlu0 0
    %86 = vperm.xlu0 %85, %v82
    %v87 = vpop.permute.xlu0 %86
    %90 = vset.pattern.permute.xlu0 0
    %91 = vperm.xlu0 %90, %v83
    %v92 = vpop.permute.xlu0 %91
    %vm94 = vcmask 97280
    %v96 = vsel %vm94, %v80, 0
    %v99 = vsel %vm94, %v81, 0
    %v101 = vsel %vm77, %v76, 0
    %v103 = vsel %vm77, %v74, 0
    %105 = vmatprep.subr.mxu0 %v79
    %106 = vmatpush1.msra.mxu0 %v78
    %107 = vmatprep.subr.mxu0 %v103
    %108 = vmatpush1.msra.mxu0 %v101
    %109 = vmatprep.subr.mxu0 0.0
    %110 = vmatpush1.msra.mxu0 0.0
    %111 = vmatprep.subr.mxu0 0.0
    %112 = vmatpush1.msra.mxu0 0.0
    %113 = vmatprep.subr.mxu0 0.0
    %114 = vmatpush1.msra.mxu0 0.0
    %115 = vmatprep.subr.mxu0 0.0
    %116 = vmatpush1.msra.mxu0 0.0
    %117 = vmatprep.subr.mxu0 0.0
    %118 = vmatpush1.msra.mxu0 0.0
    %119 = vmatprep.subr.mxu0 0.0
    %120 = vmatpush1.msra.mxu0 0.0
    %121 = vmatprep.subr.mxu0 0.0
    %122 = vmatpush1.msra.mxu0 0.0
    %123 = vmatprep.subr.mxu0 0.0
    %124 = vmatpush1.msra.mxu0 0.0
    %125 = vmatprep.subr.mxu0 0.0
    %126 = vmatpush1.msra.mxu0 0.0
    %127 = vmatprep.subr.mxu0 0.0
    %128 = vmatpush1.msra.mxu0 0.0
    %129 = vmatprep.subr.mxu0 0.0
    %130 = vmatpush1.msra.mxu0 0.0
    %131 = vmatprep.subr.mxu0 0.0
    %132 = vmatpush1.msra.mxu0 0.0
    %133 = vmatprep.subr.mxu0 0.0
    %134 = vmatpush1.msra.mxu0 0.0
    %135 = vmatprep.subr.mxu0 0.0
    %136 = vmatpush1.msra.mxu0 0.0
    %137 = vmatprep.subr.mxu0 0.0
    %138 = vmatpush1.msra.mxu0 0.0
    %139 = vmatprep.subr.mxu0 0.0
    %140 = vmatpush1.msra.mxu0 0.0
    %141 = vmatprep.subr.mxu0 0.0
    %142 = vmatpush1.msra.mxu0 0.0
    %143 = vmatprep.subr.mxu0 0.0
    %144 = vmatpush1.msra.mxu0 0.0
    %145 = vmatprep.subr.mxu0 0.0
    %146 = vmatpush1.msra.mxu0 0.0
    %147 = vmatprep.subr.mxu0 0.0
    %148 = vmatpush1.msra.mxu0 0.0
    %149 = vmatprep.subr.mxu0 0.0
    %150 = vmatpush1.msra.mxu0 0.0
    %151 = vmatprep.subr.mxu0 0.0
    %152 = vmatpush1.msra.mxu0 0.0
    %153 = vmatprep.subr.mxu0 0.0
    %154 = vmatpush1.msra.mxu0 0.0
    %155 = vmatprep.subr.mxu0 0.0
    %156 = vmatpush1.msra.mxu0 0.0
    %157 = vmatprep.subr.mxu0 0.0
    %158 = vmatpush1.msra.mxu0 0.0
    %159 = vmatprep.subr.mxu0 0.0
    %160 = vmatpush1.msra.mxu0 0.0
    %161 = vmatprep.subr.mxu0 0.0
    %162 = vmatpush1.msra.mxu0 0.0
    %163 = vmatprep.subr.mxu0 0.0
    %164 = vmatpush1.msra.mxu0 0.0
    %165 = vmatprep.subr.mxu0 0.0
    %166 = vmatpush1.msra.mxu0 0.0
    %167 = vmatprep.subr.mxu0 0.0
    %168 = vmatpush1.msra.mxu0 0.0
    %169 = vmatprep.mubr.f32.mxu0 0.0
    %170 = vmatmul.mubr.f32.gmra.mrb[0].mxu0 %v96
    %v171 = vpop.f32.mrb[0].mxu0
    %v172 = vadd.f32 %v87, %v171
    %v173 = vpop.f32.mrb[0].mxu0
    %v174 = vadd.f32 %v87, %v173
    %175 = vmatprep.mubr.f32.mxu0 0.0
    %176 = vmatmul.mubr.f32.gmra.mrb[0].mxu0 %v99
    %v177 = vpop.f32.mrb[0].mxu0
    %v178 = vadd.f32 %v92, %v177
    %v179 = vpop.f32.mrb[0].mxu0
    %v180 = vadd.f32 %v92, %v179
    %181 = vdwg.mxu0
    %v182 = vxor.u32 %v178, 2147483648
    %v183 = vxor.u32 %v180, 2147483648
    %v184 = vmul.f32 %v182, 1.442695
    %v185 = vpow.pop %v184
    %v186 = vmul.f32 %v183, 1.442695
    %v187 = vpow.pop %v186
    %v188 = vadd.f32 %v185, 1.0
    %v189 = vadd.f32 %v187, 1.0
    %v190 = vrcp.pop %v188
    %v191 = vmul.f32 1.0, %v190
    %v192 = vrcp.pop %v189
    %v193 = vmul.f32 1.0, %v192
    %v194 = vmul.f32 %v172, %v191
    %v195 = vmul.f32 %v174, %v193
    %v196 = vld [vmem:[%s3] sm:$0xf]
    %v197 = vld [vmem:[%s4] sm:$0xf]
    %199 = vset.pattern.permute.xlu0 0
    %200 = vperm.xlu0 %199, %v197
    %v201 = vpop.permute.xlu0 %200
    %vm203 = vcmask 64512
    %v205 = vsel %vm203, %v196, 0
    %207 = vmatprep.subr.mxu0 %v195
    %208 = vmatpush1.msra.mxu0 %v194
    %209 = vmatprep.subr.mxu0 0.0
    %210 = vmatpush1.msra.mxu0 0.0
    %211 = vmatprep.subr.mxu0 0.0
    %212 = vmatpush1.msra.mxu0 0.0
    %213 = vmatprep.subr.mxu0 0.0
    %214 = vmatpush1.msra.mxu0 0.0
    %215 = vmatprep.subr.mxu0 0.0
    %216 = vmatpush1.msra.mxu0 0.0
    %217 = vmatprep.subr.mxu0 0.0
    %218 = vmatpush1.msra.mxu0 0.0
    %219 = vmatprep.subr.mxu0 0.0
    %220 = vmatpush1.msra.mxu0 0.0
    %221 = vmatprep.subr.mxu0 0.0
    %222 = vmatpush1.msra.mxu0 0.0
    %223 = vmatprep.subr.mxu0 0.0
    %224 = vmatpush1.msra.mxu0 0.0
    %225 = vmatprep.subr.mxu0 0.0
    %226 = vmatpush1.msra.mxu0 0.0
    %227 = vmatprep.subr.mxu0 0.0
    %228 = vmatpush1.msra.mxu0 0.0
    %229 = vmatprep.subr.mxu0 0.0
    %230 = vmatpush1.msra.mxu0 0.0
    %231 = vmatprep.subr.mxu0 0.0
    %232 = vmatpush1.msra.mxu0 0.0
    %233 = vmatprep.subr.mxu0 0.0
    %234 = vmatpush1.msra.mxu0 0.0
    %235 = vmatprep.subr.mxu0 0.0
    %236 = vmatpush1.msra.mxu0 0.0
    %237 = vmatprep.subr.mxu0 0.0
    %238 = vmatpush1.msra.mxu0 0.0
    %239 = vmatprep.subr.mxu0 0.0
    %240 = vmatpush1.msra.mxu0 0.0
    %241 = vmatprep.subr.mxu0 0.0
    %242 = vmatpush1.msra.mxu0 0.0
    %243 = vmatprep.subr.mxu0 0.0
    %244 = vmatpush1.msra.mxu0 0.0
    %245 = vmatprep.subr.mxu0 0.0
    %246 = vmatpush1.msra.mxu0 0.0
    %247 = vmatprep.subr.mxu0 0.0
    %248 = vmatpush1.msra.mxu0 0.0
    %249 = vmatprep.subr.mxu0 0.0
    %250 = vmatpush1.msra.mxu0 0.0
    %251 = vmatprep.subr.mxu0 0.0
    %252 = vmatpush1.msra.mxu0 0.0
    %253 = vmatprep.subr.mxu0 0.0
    %254 = vmatpush1.msra.mxu0 0.0
    %255 = vmatprep.subr.mxu0 0.0
    %256 = vmatpush1.msra.mxu0 0.0
    %257 = vmatprep.subr.mxu0 0.0
    %258 = vmatpush1.msra.mxu0 0.0
    %259 = vmatprep.subr.mxu0 0.0
    %260 = vmatpush1.msra.mxu0 0.0
    %261 = vmatprep.subr.mxu0 0.0
    %262 = vmatpush1.msra.mxu0 0.0
    %263 = vmatprep.subr.mxu0 0.0
    %264 = vmatpush1.msra.mxu0 0.0
    %265 = vmatprep.subr.mxu0 0.0
    %266 = vmatpush1.msra.mxu0 0.0
    %267 = vmatprep.subr.mxu0 0.0
    %268 = vmatpush1.msra.mxu0 0.0
    %269 = vmatprep.subr.mxu0 0.0
    %270 = vmatpush1.msra.mxu0 0.0
    %271 = vmatprep.mubr.f32.mxu0 0.0
    %272 = vmatmul.mubr.f32.gmra.mrb[0].mxu0 %v205
    %v273 = vpop.f32.mrb[0].mxu0
    %v274 = vadd.f32 %v201, %v273
    %v275 = vpop.f32.mrb[0].mxu0
    %v276 = vadd.f32 %v201, %v275
    %277 = vdwg.mxu0
    %s278 = scalar_lea.vmem %s0, 8
    %v279 = vld [vmem:[%s278] sm:$0xff]
    %v281 = vcombine.high %v279, %v279
    %v283 = vcombine.low %v279, %v279
    %284 = vrot.lane.b32.xlu0 %v283, 112
    %v285 = vpop.permute.xlu0 %284
    %286 = vrot.lane.b32.xlu0 %v279, 112
    %v287 = vpop.permute.xlu0 %286
    %v288 = vsel %vm67, %v285, %v287
    %291 = vrot.lane.b32.xlu0 %v279, 96
    %v292 = vpop.permute.xlu0 %291
    %293 = vrot.lane.b32.xlu0 %v281, 96
    %v294 = vpop.permute.xlu0 %293
    %v295 = vsel %vm75, %v292, %v294
    %v296 = vsel %vm77, %v279, %v288
    %v297 = vsel %vm77, %v281, %v287
    %v298 = vsel %vm77, %v295, 0
    %v300 = vsel %vm77, %v294, 0
    %302 = vmatprep.subr.mxu0 %v297
    %303 = vmatpush1.msra.mxu0 %v296
    %304 = vmatprep.subr.mxu0 %v300
    %305 = vmatpush1.msra.mxu0 %v298
    %306 = vmatprep.subr.mxu0 0.0
    %307 = vmatpush1.msra.mxu0 0.0
    %308 = vmatprep.subr.mxu0 0.0
    %309 = vmatpush1.msra.mxu0 0.0
    %310 = vmatprep.subr.mxu0 0.0
    %311 = vmatpush1.msra.mxu0 0.0
    %312 = vmatprep.subr.mxu0 0.0
    %313 = vmatpush1.msra.mxu0 0.0
    %314 = vmatprep.subr.mxu0 0.0
    %315 = vmatpush1.msra.mxu0 0.0
    %316 = vmatprep.subr.mxu0 0.0
    %317 = vmatpush1.msra.mxu0 0.0
    %318 = vmatprep.subr.mxu0 0.0
    %319 = vmatpush1.msra.mxu0 0.0
    %320 = vmatprep.subr.mxu0 0.0
    %321 = vmatpush1.msra.mxu0 0.0
    %322 = vmatprep.subr.mxu0 0.0
    %323 = vmatpush1.msra.mxu0 0.0
    %324 = vmatprep.subr.mxu0 0.0
    %325 = vmatpush1.msra.mxu0 0.0
    %326 = vmatprep.subr.mxu0 0.0
    %327 = vmatpush1.msra.mxu0 0.0
    %328 = vmatprep.subr.mxu0 0.0
    %329 = vmatpush1.msra.mxu0 0.0
    %330 = vmatprep.subr.mxu0 0.0
    %331 = vmatpush1.msra.mxu0 0.0
    %332 = vmatprep.subr.mxu0 0.0
    %333 = vmatpush1.msra.mxu0 0.0
    %334 = vmatprep.subr.mxu0 0.0
    %335 = vmatpush1.msra.mxu0 0.0
    %336 = vmatprep.subr.mxu0 0.0
    %337 = vmatpush1.msra.mxu0 0.0
    %338 = vmatprep.subr.mxu0 0.0
    %339 = vmatpush1.msra.mxu0 0.0
    %340 = vmatprep.subr.mxu0 0.0
    %341 = vmatpush1.msra.mxu0 0.0
    %342 = vmatprep.subr.mxu0 0.0
    %343 = vmatpush1.msra.mxu0 0.0
    %344 = vmatprep.subr.mxu0 0.0
    %345 = vmatpush1.msra.mxu0 0.0
    %346 = vmatprep.subr.mxu0 0.0
    %347 = vmatpush1.msra.mxu0 0.0
    %348 = vmatprep.subr.mxu0 0.0
    %349 = vmatpush1.msra.mxu0 0.0
    %350 = vmatprep.subr.mxu0 0.0
    %351 = vmatpush1.msra.mxu0 0.0
    %352 = vmatprep.subr.mxu0 0.0
    %353 = vmatpush1.msra.mxu0 0.0
    %354 = vmatprep.subr.mxu0 0.0
    %355 = vmatpush1.msra.mxu0 0.0
    %356 = vmatprep.subr.mxu0 0.0
    %357 = vmatpush1.msra.mxu0 0.0
    %358 = vmatprep.subr.mxu0 0.0
    %359 = vmatpush1.msra.mxu0 0.0
    %360 = vmatprep.subr.mxu0 0.0
    %361 = vmatpush1.msra.mxu0 0.0
    %362 = vmatprep.subr.mxu0 0.0
    %363 = vmatpush1.msra.mxu0 0.0
    %364 = vmatprep.subr.mxu0 0.0
    %365 = vmatpush1.msra.mxu0 0.0
    %366 = vmatprep.mubr.f32.mxu0 0.0
    %367 = vmatmul.mubr.f32.gmra.mrb[0].mxu0 %v96
    %v368 = vpop.f32.mrb[0].mxu0
    %v369 = vadd.f32 %v87, %v368
    %v370 = vpop.f32.mrb[0].mxu0
    %v371 = vadd.f32 %v87, %v370
    %372 = vmatprep.mubr.f32.mxu0 0.0
    %373 = vmatmul.mubr.f32.gmra.mrb[0].mxu0 %v99
    %v374 = vpop.f32.mrb[0].mxu0
    %v375 = vadd.f32 %v92, %v374
    %v376 = vpop.f32.mrb[0].mxu0
    %v377 = vadd.f32 %v92, %v376
    %378 = vdwg.mxu0
    %v379 = vxor.u32 %v375, 2147483648
    %v380 = vxor.u32 %v377, 2147483648
    %v381 = vmul.f32 %v379, 1.442695
    %v382 = vpow.pop %v381
    %v383 = vmul.f32 %v380, 1.442695
    %v384 = vpow.pop %v383
    %v385 = vadd.f32 %v382, 1.0
    %v386 = vadd.f32 %v384, 1.0
    %v387 = vrcp.pop %v385
    %v388 = vmul.f32 1.0, %v387
    %v389 = vrcp.pop %v386
    %v390 = vmul.f32 1.0, %v389
    %v391 = vmul.f32 %v369, %v388
    %v392 = vmul.f32 %v371, %v390
    %393 = vmatprep.subr.mxu0 %v392
    %394 = vmatpush1.msra.mxu0 %v391
    %395 = vmatprep.subr.mxu0 0.0
    %396 = vmatpush1.msra.mxu0 0.0
    %397 = vmatprep.subr.mxu0 0.0
    %398 = vmatpush1.msra.mxu0 0.0
    %399 = vmatprep.subr.mxu0 0.0
    %400 = vmatpush1.msra.mxu0 0.0
    %401 = vmatprep.subr.mxu0 0.0
    %402 = vmatpush1.msra.mxu0 0.0
    %403 = vmatprep.subr.mxu0 0.0
    %404 = vmatpush1.msra.mxu0 0.0
    %405 = vmatprep.subr.mxu0 0.0
    %406 = vmatpush1.msra.mxu0 0.0
    %407 = vmatprep.subr.mxu0 0.0
    %408 = vmatpush1.msra.mxu0 0.0
    %409 = vmatprep.subr.mxu0 0.0
    %410 = vmatpush1.msra.mxu0 0.0
    %411 = vmatprep.subr.mxu0 0.0
    %412 = vmatpush1.msra.mxu0 0.0
    %413 = vmatprep.subr.mxu0 0.0
    %414 = vmatpush1.msra.mxu0 0.0
    %415 = vmatprep.subr.mxu0 0.0
    %416 = vmatpush1.msra.mxu0 0.0
    %417 = vmatprep.subr.mxu0 0.0
    %418 = vmatpush1.msra.mxu0 0.0
    %419 = vmatprep.subr.mxu0 0.0
    %420 = vmatpush1.msra.mxu0 0.0
    %421 = vmatprep.subr.mxu0 0.0
    %422 = vmatpush1.msra.mxu0 0.0
    %423 = vmatprep.subr.mxu0 0.0
    %424 = vmatpush1.msra.mxu0 0.0
    %425 = vmatprep.subr.mxu0 0.0
    %426 = vmatpush1.msra.mxu0 0.0
    %427 = vmatprep.subr.mxu0 0.0
    %428 = vmatpush1.msra.mxu0 0.0
    %429 = vmatprep.subr.mxu0 0.0
    %430 = vmatpush1.msra.mxu0 0.0
    %431 = vmatprep.subr.mxu0 0.0
    %432 = vmatpush1.msra.mxu0 0.0
    %433 = vmatprep.subr.mxu0 0.0
    %434 = vmatpush1.msra.mxu0 0.0
    %435 = vmatprep.subr.mxu0 0.0
    %436 = vmatpush1.msra.mxu0 0.0
    %437 = vmatprep.subr.mxu0 0.0
    %438 = vmatpush1.msra.mxu0 0.0
    %439 = vmatprep.subr.mxu0 0.0
    %440 = vmatpush1.msra.mxu0 0.0
    %441 = vmatprep.subr.mxu0 0.0
    %442 = vmatpush1.msra.mxu0 0.0
    %443 = vmatprep.subr.mxu0 0.0
    %444 = vmatpush1.msra.mxu0 0.0
    %445 = vmatprep.subr.mxu0 0.0
    %446 = vmatpush1.msra.mxu0 0.0
    %447 = vmatprep.subr.mxu0 0.0
    %448 = vmatpush1.msra.mxu0 0.0
    %449 = vmatprep.subr.mxu0 0.0
    %450 = vmatpush1.msra.mxu0 0.0
    %451 = vmatprep.subr.mxu0 0.0
    %452 = vmatpush1.msra.mxu0 0.0
    %453 = vmatprep.subr.mxu0 0.0
    %454 = vmatpush1.msra.mxu0 0.0
    %455 = vmatprep.subr.mxu0 0.0
    %456 = vmatpush1.msra.mxu0 0.0
    %457 = vmatprep.mubr.f32.mxu0 0.0
    %458 = vmatmul.mubr.f32.gmra.mrb[0].mxu0 %v205
    %v459 = vpop.f32.mrb[0].mxu0
    %v460 = vadd.f32 %v201, %v459
    %v461 = vpop.f32.mrb[0].mxu0
    %v462 = vadd.f32 %v201, %v461
    %463 = vdwg.mxu0
    %v466 = vrot.slane %v274, 7
    %v467 = vrot.slane %v276, 7
    %468 = vrot.lane.b32.xlu0 %v466, 16
    %v469 = vpop.permute.xlu0 %468
    %470 = vrot.lane.b32.xlu0 %v467, 16
    %v471 = vpop.permute.xlu0 %470
    %vm472 = vcmask 130048
    %v473 = vsel %vm472, %v469, %v471
    %v476 = vrot.slane %v274, 6
    %v477 = vrot.slane %v276, 6
    %478 = vrot.lane.b32.xlu0 %v476, 16
    %v479 = vpop.permute.xlu0 %478
    %480 = vrot.lane.b32.xlu0 %v477, 16
    %v481 = vpop.permute.xlu0 %480
    %v482 = vsel %vm472, %v479, %v481
    %v485 = vrot.slane %v274, 5
    %v486 = vrot.slane %v276, 5
    %487 = vrot.lane.b32.xlu0 %v485, 16
    %v488 = vpop.permute.xlu0 %487
    %489 = vrot.lane.b32.xlu0 %v486, 16
    %v490 = vpop.permute.xlu0 %489
    %v491 = vsel %vm472, %v488, %v490
    %v494 = vrot.slane %v274, 4
    %v495 = vrot.slane %v276, 4
    %496 = vrot.lane.b32.xlu0 %v494, 16
    %v497 = vpop.permute.xlu0 %496
    %498 = vrot.lane.b32.xlu0 %v495, 16
    %v499 = vpop.permute.xlu0 %498
    %v500 = vsel %vm472, %v497, %v499
    %v504 = vrot.slane %v460, 7
    %v505 = vrot.slane %v462, 7
    %506 = vrot.lane.b32.xlu0 %v504, 16
    %v507 = vpop.permute.xlu0 %506
    %508 = vrot.lane.b32.xlu0 %v505, 16
    %v509 = vpop.permute.xlu0 %508
    %v510 = vsel %vm472, %v507, %v509
    %v513 = vrot.slane %v460, 6
    %v514 = vrot.slane %v462, 6
    %515 = vrot.lane.b32.xlu0 %v513, 16
    %v516 = vpop.permute.xlu0 %515
    %517 = vrot.lane.b32.xlu0 %v514, 16
    %v518 = vpop.permute.xlu0 %517
    %v519 = vsel %vm472, %v516, %v518
    %v522 = vrot.slane %v460, 5
    %v523 = vrot.slane %v462, 5
    %524 = vrot.lane.b32.xlu0 %v522, 16
    %v525 = vpop.permute.xlu0 %524
    %526 = vrot.lane.b32.xlu0 %v523, 16
    %v527 = vpop.permute.xlu0 %526
    %v528 = vsel %vm472, %v525, %v527
    %v531 = vrot.slane %v460, 4
    %v532 = vrot.slane %v462, 4
    %533 = vrot.lane.b32.xlu0 %v531, 16
    %v534 = vpop.permute.xlu0 %533
    %535 = vrot.lane.b32.xlu0 %v532, 16
    %v536 = vpop.permute.xlu0 %535
    %v537 = vsel %vm472, %v534, %v536
    %vm539 = vcmask 1040384
    %v540 = vsel %vm539, %v274, %v473
    %vm541 = vcmask 1041408
    %v542 = vsel %vm541, %v540, %v466
    %vm543 = vcmask 1042432
    %v544 = vsel %vm543, %v542, %v482
    %v545 = vsel %vm77, %v544, %v476
    %vm546 = vcmask 1044480
    %v547 = vsel %vm546, %v545, %v491
    %vm548 = vcmask 1045504
    %v549 = vsel %vm548, %v547, %v485
    %vm550 = vcmask 1046528
    %v551 = vsel %vm550, %v549, %v500
    %v552 = vsel %vm539, %v460, %v510
    %v553 = vsel %vm541, %v552, %v504
    %v554 = vsel %vm543, %v553, %v519
    %v555 = vsel %vm77, %v554, %v513
    %v556 = vsel %vm546, %v555, %v528
    %v557 = vsel %vm548, %v556, %v522
    %v558 = vsel %vm550, %v557, %v537
    %v559 = vld [vmem:[%s5] sm:$0xff]
    %v560 = vld [vmem:[%s5 + $0x8] sm:$0xff]
    %v562 = vsel %vm472, %v559, 0
    %v565 = vsel %vm472, %v560, 0
    %567 = vmatprep.subr.mxu0 0.0
    %568 = vmatpush1.msra.mxu0 %v551
    %569 = vmatprep.subr.mxu0 0.0
    %570 = vmatpush1.msra.mxu0 %v558
    %571 = vmatprep.subr.mxu0 0.0
    %572 = vmatpush1.msra.mxu0 0.0
    %573 = vmatprep.subr.mxu0 0.0
    %574 = vmatpush1.msra.mxu0 0.0
    %575 = vmatprep.subr.mxu0 0.0
    %576 = vmatpush1.msra.mxu0 0.0
    %577 = vmatprep.subr.mxu0 0.0
    %578 = vmatpush1.msra.mxu0 0.0
    %579 = vmatprep.subr.mxu0 0.0
    %580 = vmatpush1.msra.mxu0 0.0
    %581 = vmatprep.subr.mxu0 0.0
    %582 = vmatpush1.msra.mxu0 0.0
    %583 = vmatprep.subr.mxu0 0.0
    %584 = vmatpush1.msra.mxu0 0.0
    %585 = vmatprep.subr.mxu0 0.0
    %586 = vmatpush1.msra.mxu0 0.0
    %587 = vmatprep.subr.mxu0 0.0
    %588 = vmatpush1.msra.mxu0 0.0
    %589 = vmatprep.subr.mxu0 0.0
    %590 = vmatpush1.msra.mxu0 0.0
    %591 = vmatprep.subr.mxu0 0.0
    %592 = vmatpush1.msra.mxu0 0.0
    %593 = vmatprep.subr.mxu0 0.0
    %594 = vmatpush1.msra.mxu0 0.0
    %595 = vmatprep.subr.mxu0 0.0
    %596 = vmatpush1.msra.mxu0 0.0
    %597 = vmatprep.subr.mxu0 0.0
    %598 = vmatpush1.msra.mxu0 0.0
    %599 = vmatprep.subr.mxu0 0.0
    %600 = vmatpush1.msra.mxu0 0.0
    %601 = vmatprep.subr.mxu0 0.0
    %602 = vmatpush1.msra.mxu0 0.0
    %603 = vmatprep.subr.mxu0 0.0
    %604 = vmatpush1.msra.mxu0 0.0
    %605 = vmatprep.subr.mxu0 0.0
    %606 = vmatpush1.msra.mxu0 0.0
    %607 = vmatprep.subr.mxu0 0.0
    %608 = vmatpush1.msra.mxu0 0.0
    %609 = vmatprep.subr.mxu0 0.0
    %610 = vmatpush1.msra.mxu0 0.0
    %611 = vmatprep.subr.mxu0 0.0
    %612 = vmatpush1.msra.mxu0 0.0
    %613 = vmatprep.subr.mxu0 0.0
    %614 = vmatpush1.msra.mxu0 0.0
    %615 = vmatprep.subr.mxu0 0.0
    %616 = vmatpush1.msra.mxu0 0.0
    %617 = vmatprep.subr.mxu0 0.0
    %618 = vmatpush1.msra.mxu0 0.0
    %619 = vmatprep.subr.mxu0 0.0
    %620 = vmatpush1.msra.mxu0 0.0
    %621 = vmatprep.subr.mxu0 0.0
    %622 = vmatpush1.msra.mxu0 0.0
    %623 = vmatprep.subr.mxu0 0.0
    %624 = vmatpush1.msra.mxu0 0.0
    %625 = vmatprep.subr.mxu0 0.0
    %626 = vmatpush1.msra.mxu0 0.0
    %627 = vmatprep.subr.mxu0 0.0
    %628 = vmatpush1.msra.mxu0 0.0
    %629 = vmatprep.subr.mxu0 0.0
    %630 = vmatpush1.msra.mxu0 0.0
    %631 = vmatprep.mubr.f32.mxu0 0.0
    %632 = vmatmul.mubr.f32.gmra.mrb[0].mxu0 %v562
    %v633 = vpop.f32.mrb[0].mxu0
    %v634 = vadd.f32 0.0, %v633
    %v635 = vpop.f32.mrb[0].mxu0
    %636 = vmatprep.mubr.f32.mxu0 0.0
    %637 = vmatmul.mubr.f32.gmra.mrb[0].mxu0 %v565
    %v638 = vpop.f32.mrb[0].mxu0
    %v639 = vadd.f32 0.0, %v638
    %v640 = vpop.f32.mrb[0].mxu0
    %641 = vdwg.mxu0
    %642 = vmatprep.subr.mxu0 0.0
    %643 = vmatpush1.msra.mxu0 %v634
    %644 = vmatprep.subr.mxu0 0.0
    %645 = vmatpush1.msra.mxu0 %v639
    %646 = vmatprep.subr.mxu0 0.0
    %647 = vmatpush1.msra.mxu0 0.0
    %648 = vmatprep.subr.mxu0 0.0
    %649 = vmatpush1.msra.mxu0 0.0
    %650 = vmatprep.subr.mxu0 0.0
    %651 = vmatpush1.msra.mxu0 0.0
    %652 = vmatprep.subr.mxu0 0.0
    %653 = vmatpush1.msra.mxu0 0.0
    %654 = vmatprep.subr.mxu0 0.0
    %655 = vmatpush1.msra.mxu0 0.0
    %656 = vmatprep.subr.mxu0 0.0
    %657 = vmatpush1.msra.mxu0 0.0
    %658 = vmatprep.subr.mxu0 0.0
    %659 = vmatpush1.msra.mxu0 0.0
    %660 = vmatprep.subr.mxu0 0.0
    %661 = vmatpush1.msra.mxu0 0.0
    %662 = vmatprep.subr.mxu0 0.0
    %663 = vmatpush1.msra.mxu0 0.0
    %664 = vmatprep.subr.mxu0 0.0
    %665 = vmatpush1.msra.mxu0 0.0
    %666 = vmatprep.subr.mxu0 0.0
    %667 = vmatpush1.msra.mxu0 0.0
    %668 = vmatprep.subr.mxu0 0.0
    %669 = vmatpush1.msra.mxu0 0.0
    %670 = vmatprep.subr.mxu0 0.0
    %671 = vmatpush1.msra.mxu0 0.0
    %672 = vmatprep.subr.mxu0 0.0
    %673 = vmatpush1.msra.mxu0 0.0
    %674 = vmatprep.subr.mxu0 0.0
    %675 = vmatpush1.msra.mxu0 0.0
    %676 = vmatprep.subr.mxu0 0.0
    %677 = vmatpush1.msra.mxu0 0.0
    %678 = vmatprep.subr.mxu0 0.0
    %679 = vmatpush1.msra.mxu0 0.0
    %680 = vmatprep.subr.mxu0 0.0
    %681 = vmatpush1.msra.mxu0 0.0
    %682 = vmatprep.subr.mxu0 0.0
    %683 = vmatpush1.msra.mxu0 0.0
    %684 = vmatprep.subr.mxu0 0.0
    %685 = vmatpush1.msra.mxu0 0.0
    %686 = vmatprep.subr.mxu0 0.0
    %687 = vmatpush1.msra.mxu0 0.0
    %688 = vmatprep.subr.mxu0 0.0
    %689 = vmatpush1.msra.mxu0 0.0
    %690 = vmatprep.subr.mxu0 0.0
    %691 = vmatpush1.msra.mxu0 0.0
    %692 = vmatprep.subr.mxu0 0.0
    %693 = vmatpush1.msra.mxu0 0.0
    %694 = vmatprep.subr.mxu0 0.0
    %695 = vmatpush1.msra.mxu0 0.0
    %696 = vmatprep.subr.mxu0 0.0
    %697 = vmatpush1.msra.mxu0 0.0
    %698 = vmatprep.subr.mxu0 0.0
    %699 = vmatpush1.msra.mxu0 0.0
    %700 = vmatprep.subr.mxu0 0.0
    %701 = vmatpush1.msra.mxu0 0.0
    %702 = vmatprep.subr.mxu0 0.0
    %703 = vmatpush1.msra.mxu0 0.0
    %704 = vmatprep.subr.mxu0 0.0
    %705 = vmatpush1.msra.mxu0 0.0
    %706 = vmatprep.mubr.f32.mxu0 0.0
    %707 = vmatmul.mubr.f32.gmra.mrb[0].mxu0 %v562
    %v708 = vpop.f32.mrb[0].mxu0
    %v709 = vadd.f32 0.0, %v708
    %v710 = vpop.f32.mrb[0].mxu0
    %711 = vmatprep.mubr.f32.mxu0 0.0
    %712 = vmatmul.mubr.f32.gmra.mrb[0].mxu0 %v565
    %v713 = vpop.f32.mrb[0].mxu0
    %v714 = vadd.f32 0.0, %v713
    %v715 = vpop.f32.mrb[0].mxu0
    %716 = vdwg.mxu0
    %v717 = vmul.f32 %v709, 2.0
    %v718 = vmul.f32 %v714, 2.0
    %v719 = vsub.f32 %v717, %v551
    %v720 = vsub.f32 %v718, %v558
    %723 = vrot.lane.b32.xlu0 %v634, 16
    %v724 = vpop.permute.xlu0 %723
    %725 = vrot.lane.b32.xlu0 %v639, 16
    %v726 = vpop.permute.xlu0 %725
    %731 = vrot.lane.b32.xlu0 %v719, 32
    %v732 = vpop.permute.xlu0 %731
    %733 = vrot.lane.b32.xlu0 %v720, 32
    %v734 = vpop.permute.xlu0 %733
    %v737 = vsel %vm472, %v551, %v724
    %v738 = vsel %vm472, %v558, %v726
    %vm739 = vcmask 261120
    %v740 = vsel %vm739, %v737, %v732
    %v741 = vsel %vm739, %v738, %v734
    %v742 = vld [vmem:[%s6] sm:$0xff]
    %v743 = vld [vmem:[%s6 + $0x8] sm:$0xff]
    %v744 = vld [vmem:[%s6 + $0x10] sm:$0xff]
    %v745 = vld [vmem:[%s6 + $0x18] sm:$0xff]
    %v746 = vld [vmem:[%s6 + $0x20] sm:$0xff]
    %v747 = vld [vmem:[%s6 + $0x28] sm:$0xff]
    %vm748 = vcmask 392192
    %v750 = vsel %vm748, %v740, 0
    %v753 = vsel %vm748, %v741, 0
    %755 = vmatprep.subr.mxu0 0.0
    %756 = vmatpush1.msra.mxu0 %v742
    %757 = vmatprep.subr.mxu0 0.0
    %758 = vmatpush1.msra.mxu0 %v743
    %759 = vmatprep.subr.mxu0 0.0
    %760 = vmatpush1.msra.mxu0 %v744
    %761 = vmatprep.subr.mxu0 0.0
    %762 = vmatpush1.msra.mxu0 %v745
    %763 = vmatprep.subr.mxu0 0.0
    %764 = vmatpush1.msra.mxu0 %v746
    %765 = vmatprep.subr.mxu0 0.0
    %766 = vmatpush1.msra.mxu0 %v747
    %767 = vmatprep.subr.mxu0 0.0
    %768 = vmatpush1.msra.mxu0 0.0
    %769 = vmatprep.subr.mxu0 0.0
    %770 = vmatpush1.msra.mxu0 0.0
    %771 = vmatprep.subr.mxu0 0.0
    %772 = vmatpush1.msra.mxu0 0.0
    %773 = vmatprep.subr.mxu0 0.0
    %774 = vmatpush1.msra.mxu0 0.0
    %775 = vmatprep.subr.mxu0 0.0
    %776 = vmatpush1.msra.mxu0 0.0
    %777 = vmatprep.subr.mxu0 0.0
    %778 = vmatpush1.msra.mxu0 0.0
    %779 = vmatprep.subr.mxu0 0.0
    %780 = vmatpush1.msra.mxu0 0.0
    %781 = vmatprep.subr.mxu0 0.0
    %782 = vmatpush1.msra.mxu0 0.0
    %783 = vmatprep.subr.mxu0 0.0
    %784 = vmatpush1.msra.mxu0 0.0
    %785 = vmatprep.subr.mxu0 0.0
    %786 = vmatpush1.msra.mxu0 0.0
    %787 = vmatprep.subr.mxu0 0.0
    %788 = vmatpush1.msra.mxu0 0.0
    %789 = vmatprep.subr.mxu0 0.0
    %790 = vmatpush1.msra.mxu0 0.0
    %791 = vmatprep.subr.mxu0 0.0
    %792 = vmatpush1.msra.mxu0 0.0
    %793 = vmatprep.subr.mxu0 0.0
    %794 = vmatpush1.msra.mxu0 0.0
    %795 = vmatprep.subr.mxu0 0.0
    %796 = vmatpush1.msra.mxu0 0.0
    %797 = vmatprep.subr.mxu0 0.0
    %798 = vmatpush1.msra.mxu0 0.0
    %799 = vmatprep.subr.mxu0 0.0
    %800 = vmatpush1.msra.mxu0 0.0
    %801 = vmatprep.subr.mxu0 0.0
    %802 = vmatpush1.msra.mxu0 0.0
    %803 = vmatprep.subr.mxu0 0.0
    %804 = vmatpush1.msra.mxu0 0.0
    %805 = vmatprep.subr.mxu0 0.0
    %806 = vmatpush1.msra.mxu0 0.0
    %807 = vmatprep.subr.mxu0 0.0
    %808 = vmatpush1.msra.mxu0 0.0
    %809 = vmatprep.subr.mxu0 0.0
    %810 = vmatpush1.msra.mxu0 0.0
    %811 = vmatprep.subr.mxu0 0.0
    %812 = vmatpush1.msra.mxu0 0.0
    %813 = vmatprep.subr.mxu0 0.0
    %814 = vmatpush1.msra.mxu0 0.0
    %815 = vmatprep.subr.mxu0 0.0
    %816 = vmatpush1.msra.mxu0 0.0
    %817 = vmatprep.subr.mxu0 0.0
    %818 = vmatpush1.msra.mxu0 0.0
    %819 = vmatprep.mubr.f32.mxu0 0.0
    %820 = vmatmul.mubr.f32.gmra.mrb[0].mxu0 %v750
    %v821 = vpop.f32.mrb[0].mxu0
    %v822 = vadd.f32 0.0, %v821
    %v823 = vpop.f32.mrb[0].mxu0
    %824 = vmatprep.mubr.f32.mxu0 0.0
    %825 = vmatmul.mubr.f32.gmra.mrb[0].mxu0 %v753
    %v826 = vpop.f32.mrb[0].mxu0
    %v827 = vadd.f32 0.0, %v826
    %v828 = vpop.f32.mrb[0].mxu0
    %829 = vdwg.mxu0
    %832 = vrot.lane.b32.xlu0 %v551, 112
    %v833 = vpop.permute.xlu0 %832
    %834 = vrot.lane.b32.xlu0 %v558, 112
    %v835 = vpop.permute.xlu0 %834
    %838 = vrot.lane.b32.xlu0 %v719, 16
    %v839 = vpop.permute.xlu0 %838
    %840 = vrot.lane.b32.xlu0 %v720, 16
    %v841 = vpop.permute.xlu0 %840
    %v844 = vsel %vm472, %v833, %v634
    %v845 = vsel %vm472, %v835, %v639
    %v846 = vsel %vm739, %v844, %v839
    %v847 = vsel %vm739, %v845, %v841
    %v849 = vsel %vm748, %v846, 0
    %v852 = vsel %vm748, %v847, 0
    %854 = vmatprep.subr.mxu0 0.0
    %855 = vmatpush1.msra.mxu0 %v742
    %856 = vmatprep.subr.mxu0 0.0
    %857 = vmatpush1.msra.mxu0 %v743
    %858 = vmatprep.subr.mxu0 0.0
    %859 = vmatpush1.msra.mxu0 %v744
    %860 = vmatprep.subr.mxu0 0.0
    %861 = vmatpush1.msra.mxu0 %v745
    %862 = vmatprep.subr.mxu0 0.0
    %863 = vmatpush1.msra.mxu0 %v746
    %864 = vmatprep.subr.mxu0 0.0
    %865 = vmatpush1.msra.mxu0 %v747
    %866 = vmatprep.subr.mxu0 0.0
    %867 = vmatpush1.msra.mxu0 0.0
    %868 = vmatprep.subr.mxu0 0.0
    %869 = vmatpush1.msra.mxu0 0.0
    %870 = vmatprep.subr.mxu0 0.0
    %871 = vmatpush1.msra.mxu0 0.0
    %872 = vmatprep.subr.mxu0 0.0
    %873 = vmatpush1.msra.mxu0 0.0
    %874 = vmatprep.subr.mxu0 0.0
    %875 = vmatpush1.msra.mxu0 0.0
    %876 = vmatprep.subr.mxu0 0.0
    %877 = vmatpush1.msra.mxu0 0.0
    %878 = vmatprep.subr.mxu0 0.0
    %879 = vmatpush1.msra.mxu0 0.0
    %880 = vmatprep.subr.mxu0 0.0
    %881 = vmatpush1.msra.mxu0 0.0
    %882 = vmatprep.subr.mxu0 0.0
    %883 = vmatpush1.msra.mxu0 0.0
    %884 = vmatprep.subr.mxu0 0.0
    %885 = vmatpush1.msra.mxu0 0.0
    %886 = vmatprep.subr.mxu0 0.0
    %887 = vmatpush1.msra.mxu0 0.0
    %888 = vmatprep.subr.mxu0 0.0
    %889 = vmatpush1.msra.mxu0 0.0
    %890 = vmatprep.subr.mxu0 0.0
    %891 = vmatpush1.msra.mxu0 0.0
    %892 = vmatprep.subr.mxu0 0.0
    %893 = vmatpush1.msra.mxu0 0.0
    %894 = vmatprep.subr.mxu0 0.0
    %895 = vmatpush1.msra.mxu0 0.0
    %896 = vmatprep.subr.mxu0 0.0
    %897 = vmatpush1.msra.mxu0 0.0
    %898 = vmatprep.subr.mxu0 0.0
    %899 = vmatpush1.msra.mxu0 0.0
    %900 = vmatprep.subr.mxu0 0.0
    %901 = vmatpush1.msra.mxu0 0.0
    %902 = vmatprep.subr.mxu0 0.0
    %903 = vmatpush1.msra.mxu0 0.0
    %904 = vmatprep.subr.mxu0 0.0
    %905 = vmatpush1.msra.mxu0 0.0
    %906 = vmatprep.subr.mxu0 0.0
    %907 = vmatpush1.msra.mxu0 0.0
    %908 = vmatprep.subr.mxu0 0.0
    %909 = vmatpush1.msra.mxu0 0.0
    %910 = vmatprep.subr.mxu0 0.0
    %911 = vmatpush1.msra.mxu0 0.0
    %912 = vmatprep.subr.mxu0 0.0
    %913 = vmatpush1.msra.mxu0 0.0
    %914 = vmatprep.subr.mxu0 0.0
    %915 = vmatpush1.msra.mxu0 0.0
    %916 = vmatprep.subr.mxu0 0.0
    %917 = vmatpush1.msra.mxu0 0.0
    %918 = vmatprep.mubr.f32.mxu0 0.0
    %919 = vmatmul.mubr.f32.gmra.mrb[0].mxu0 %v849
    %v920 = vpop.f32.mrb[0].mxu0
    %v921 = vadd.f32 0.0, %v920
    %v922 = vpop.f32.mrb[0].mxu0
    %923 = vmatprep.mubr.f32.mxu0 0.0
    %924 = vmatmul.mubr.f32.gmra.mrb[0].mxu0 %v852
    %v925 = vpop.f32.mrb[0].mxu0
    %v926 = vadd.f32 0.0, %v925
    %v927 = vpop.f32.mrb[0].mxu0
    %928 = vdwg.mxu0
    %929 = vrot.lane.b32.xlu0 %v551, 96
    %v930 = vpop.permute.xlu0 %929
    %931 = vrot.lane.b32.xlu0 %v558, 96
    %v932 = vpop.permute.xlu0 %931
    %935 = vrot.lane.b32.xlu0 %v634, 112
    %v936 = vpop.permute.xlu0 %935
    %937 = vrot.lane.b32.xlu0 %v639, 112
    %v938 = vpop.permute.xlu0 %937
    %v941 = vsel %vm472, %v930, %v936
    %v942 = vsel %vm472, %v932, %v938
    %v943 = vsel %vm739, %v941, %v719
    %v944 = vsel %vm739, %v942, %v720
    %v946 = vsel %vm748, %v943, 0
    %v949 = vsel %vm748, %v944, 0
    %951 = vmatprep.subr.mxu0 0.0
    %952 = vmatpush1.msra.mxu0 %v742
    %953 = vmatprep.subr.mxu0 0.0
    %954 = vmatpush1.msra.mxu0 %v743
    %955 = vmatprep.subr.mxu0 0.0
    %956 = vmatpush1.msra.mxu0 %v744
    %957 = vmatprep.subr.mxu0 0.0
    %958 = vmatpush1.msra.mxu0 %v745
    %959 = vmatprep.subr.mxu0 0.0
    %960 = vmatpush1.msra.mxu0 %v746
    %961 = vmatprep.subr.mxu0 0.0
    %962 = vmatpush1.msra.mxu0 %v747
    %963 = vmatprep.subr.mxu0 0.0
    %964 = vmatpush1.msra.mxu0 0.0
    %965 = vmatprep.subr.mxu0 0.0
    %966 = vmatpush1.msra.mxu0 0.0
    %967 = vmatprep.subr.mxu0 0.0
    %968 = vmatpush1.msra.mxu0 0.0
    %969 = vmatprep.subr.mxu0 0.0
    %970 = vmatpush1.msra.mxu0 0.0
    %971 = vmatprep.subr.mxu0 0.0
    %972 = vmatpush1.msra.mxu0 0.0
    %973 = vmatprep.subr.mxu0 0.0
    %974 = vmatpush1.msra.mxu0 0.0
    %975 = vmatprep.subr.mxu0 0.0
    %976 = vmatpush1.msra.mxu0 0.0
    %977 = vmatprep.subr.mxu0 0.0
    %978 = vmatpush1.msra.mxu0 0.0
    %979 = vmatprep.subr.mxu0 0.0
    %980 = vmatpush1.msra.mxu0 0.0
    %981 = vmatprep.subr.mxu0 0.0
    %982 = vmatpush1.msra.mxu0 0.0
    %983 = vmatprep.subr.mxu0 0.0
    %984 = vmatpush1.msra.mxu0 0.0
    %985 = vmatprep.subr.mxu0 0.0
    %986 = vmatpush1.msra.mxu0 0.0
    %987 = vmatprep.subr.mxu0 0.0
    %988 = vmatpush1.msra.mxu0 0.0
    %989 = vmatprep.subr.mxu0 0.0
    %990 = vmatpush1.msra.mxu0 0.0
    %991 = vmatprep.subr.mxu0 0.0
    %992 = vmatpush1.msra.mxu0 0.0
    %993 = vmatprep.subr.mxu0 0.0
    %994 = vmatpush1.msra.mxu0 0.0
    %995 = vmatprep.subr.mxu0 0.0
    %996 = vmatpush1.msra.mxu0 0.0
    %997 = vmatprep.subr.mxu0 0.0
    %998 = vmatpush1.msra.mxu0 0.0
    %999 = vmatprep.subr.mxu0 0.0
    %1000 = vmatpush1.msra.mxu0 0.0
    %1001 = vmatprep.subr.mxu0 0.0
    %1002 = vmatpush1.msra.mxu0 0.0
    %1003 = vmatprep.subr.mxu0 0.0
    %1004 = vmatpush1.msra.mxu0 0.0
    %1005 = vmatprep.subr.mxu0 0.0
    %1006 = vmatpush1.msra.mxu0 0.0
    %1007 = vmatprep.subr.mxu0 0.0
    %1008 = vmatpush1.msra.mxu0 0.0
    %1009 = vmatprep.subr.mxu0 0.0
    %1010 = vmatpush1.msra.mxu0 0.0
    %1011 = vmatprep.subr.mxu0 0.0
    %1012 = vmatpush1.msra.mxu0 0.0
    %1013 = vmatprep.subr.mxu0 0.0
    %1014 = vmatpush1.msra.mxu0 0.0
    %1015 = vmatprep.mubr.f32.mxu0 0.0
    %1016 = vmatmul.mubr.f32.gmra.mrb[0].mxu0 %v946
    %v1017 = vpop.f32.mrb[0].mxu0
    %v1018 = vadd.f32 0.0, %v1017
    %v1019 = vpop.f32.mrb[0].mxu0
    %1020 = vmatprep.mubr.f32.mxu0 0.0
    %1021 = vmatmul.mubr.f32.gmra.mrb[0].mxu0 %v949
    %v1022 = vpop.f32.mrb[0].mxu0
    %v1023 = vadd.f32 0.0, %v1022
    %v1024 = vpop.f32.mrb[0].mxu0
    %1025 = vdwg.mxu0
    %1026 = vrot.lane.b32.xlu0 %v551, 80
    %v1027 = vpop.permute.xlu0 %1026
    %1028 = vrot.lane.b32.xlu0 %v558, 80
    %v1029 = vpop.permute.xlu0 %1028
    %1032 = vrot.lane.b32.xlu0 %v634, 96
    %v1033 = vpop.permute.xlu0 %1032
    %1034 = vrot.lane.b32.xlu0 %v639, 96
    %v1035 = vpop.permute.xlu0 %1034
    %1038 = vrot.lane.b32.xlu0 %v719, 112
    %v1039 = vpop.permute.xlu0 %1038
    %1040 = vrot.lane.b32.xlu0 %v720, 112
    %v1041 = vpop.permute.xlu0 %1040
    %v1044 = vsel %vm472, %v1027, %v1033
    %v1045 = vsel %vm472, %v1029, %v1035
    %v1046 = vsel %vm739, %v1044, %v1039
    %v1047 = vsel %vm739, %v1045, %v1041
    %v1049 = vsel %vm748, %v1046, 0
    %v1052 = vsel %vm748, %v1047, 0
    %1054 = vmatprep.subr.mxu0 0.0
    %1055 = vmatpush1.msra.mxu0 %v742
    %1056 = vmatprep.subr.mxu0 0.0
    %1057 = vmatpush1.msra.mxu0 %v743
    %1058 = vmatprep.subr.mxu0 0.0
    %1059 = vmatpush1.msra.mxu0 %v744
    %1060 = vmatprep.subr.mxu0 0.0
    %1061 = vmatpush1.msra.mxu0 %v745
    %1062 = vmatprep.subr.mxu0 0.0
    %1063 = vmatpush1.msra.mxu0 %v746
    %1064 = vmatprep.subr.mxu0 0.0
    %1065 = vmatpush1.msra.mxu0 %v747
    %1066 = vmatprep.subr.mxu0 0.0
    %1067 = vmatpush1.msra.mxu0 0.0
    %1068 = vmatprep.subr.mxu0 0.0
    %1069 = vmatpush1.msra.mxu0 0.0
    %1070 = vmatprep.subr.mxu0 0.0
    %1071 = vmatpush1.msra.mxu0 0.0
    %1072 = vmatprep.subr.mxu0 0.0
    %1073 = vmatpush1.msra.mxu0 0.0
    %1074 = vmatprep.subr.mxu0 0.0
    %1075 = vmatpush1.msra.mxu0 0.0
    %1076 = vmatprep.subr.mxu0 0.0
    %1077 = vmatpush1.msra.mxu0 0.0
    %1078 = vmatprep.subr.mxu0 0.0
    %1079 = vmatpush1.msra.mxu0 0.0
    %1080 = vmatprep.subr.mxu0 0.0
    %1081 = vmatpush1.msra.mxu0 0.0
    %1082 = vmatprep.subr.mxu0 0.0
    %1083 = vmatpush1.msra.mxu0 0.0
    %1084 = vmatprep.subr.mxu0 0.0
    %1085 = vmatpush1.msra.mxu0 0.0
    %1086 = vmatprep.subr.mxu0 0.0
    %1087 = vmatpush1.msra.mxu0 0.0
    %1088 = vmatprep.subr.mxu0 0.0
    %1089 = vmatpush1.msra.mxu0 0.0
    %1090 = vmatprep.subr.mxu0 0.0
    %1091 = vmatpush1.msra.mxu0 0.0
    %1092 = vmatprep.subr.mxu0 0.0
    %1093 = vmatpush1.msra.mxu0 0.0
    %1094 = vmatprep.subr.mxu0 0.0
    %1095 = vmatpush1.msra.mxu0 0.0
    %1096 = vmatprep.subr.mxu0 0.0
    %1097 = vmatpush1.msra.mxu0 0.0
    %1098 = vmatprep.subr.mxu0 0.0
    %1099 = vmatpush1.msra.mxu0 0.0
    %1100 = vmatprep.subr.mxu0 0.0
    %1101 = vmatpush1.msra.mxu0 0.0
    %1102 = vmatprep.subr.mxu0 0.0
    %1103 = vmatpush1.msra.mxu0 0.0
    %1104 = vmatprep.subr.mxu0 0.0
    %1105 = vmatpush1.msra.mxu0 0.0
    %1106 = vmatprep.subr.mxu0 0.0
    %1107 = vmatpush1.msra.mxu0 0.0
    %1108 = vmatprep.subr.mxu0 0.0
    %1109 = vmatpush1.msra.mxu0 0.0
    %1110 = vmatprep.subr.mxu0 0.0
    %1111 = vmatpush1.msra.mxu0 0.0
    %1112 = vmatprep.subr.mxu0 0.0
    %1113 = vmatpush1.msra.mxu0 0.0
    %1114 = vmatprep.subr.mxu0 0.0
    %1115 = vmatpush1.msra.mxu0 0.0
    %1116 = vmatprep.subr.mxu0 0.0
    %1117 = vmatpush1.msra.mxu0 0.0
    %1118 = vmatprep.mubr.f32.mxu0 0.0
    %1119 = vmatmul.mubr.f32.gmra.mrb[0].mxu0 %v1049
    %v1120 = vpop.f32.mrb[0].mxu0
    %v1121 = vadd.f32 0.0, %v1120
    %v1122 = vpop.f32.mrb[0].mxu0
    %1123 = vmatprep.mubr.f32.mxu0 0.0
    %1124 = vmatmul.mubr.f32.gmra.mrb[0].mxu0 %v1052
    %v1125 = vpop.f32.mrb[0].mxu0
    %v1126 = vadd.f32 0.0, %v1125
    %v1127 = vpop.f32.mrb[0].mxu0
    %1128 = vdwg.mxu0
    %1129 = vrot.lane.b32.xlu0 %v551, 64
    %v1130 = vpop.permute.xlu0 %1129
    %1131 = vrot.lane.b32.xlu0 %v558, 64
    %v1132 = vpop.permute.xlu0 %1131
    %1135 = vrot.lane.b32.xlu0 %v634, 80
    %v1136 = vpop.permute.xlu0 %1135
    %1137 = vrot.lane.b32.xlu0 %v639, 80
    %v1138 = vpop.permute.xlu0 %1137
    %1141 = vrot.lane.b32.xlu0 %v719, 96
    %v1142 = vpop.permute.xlu0 %1141
    %1143 = vrot.lane.b32.xlu0 %v720, 96
    %v1144 = vpop.permute.xlu0 %1143
    %v1147 = vsel %vm472, %v1130, %v1136
    %v1148 = vsel %vm472, %v1132, %v1138
    %v1149 = vsel %vm739, %v1147, %v1142
    %v1150 = vsel %vm739, %v1148, %v1144
    %v1152 = vsel %vm748, %v1149, 0
    %v1155 = vsel %vm748, %v1150, 0
    %1157 = vmatprep.subr.mxu0 0.0
    %1158 = vmatpush1.msra.mxu0 %v742
    %1159 = vmatprep.subr.mxu0 0.0
    %1160 = vmatpush1.msra.mxu0 %v743
    %1161 = vmatprep.subr.mxu0 0.0
    %1162 = vmatpush1.msra.mxu0 %v744
    %1163 = vmatprep.subr.mxu0 0.0
    %1164 = vmatpush1.msra.mxu0 %v745
    %1165 = vmatprep.subr.mxu0 0.0
    %1166 = vmatpush1.msra.mxu0 %v746
    %1167 = vmatprep.subr.mxu0 0.0
    %1168 = vmatpush1.msra.mxu0 %v747
    %1169 = vmatprep.subr.mxu0 0.0
    %1170 = vmatpush1.msra.mxu0 0.0
    %1171 = vmatprep.subr.mxu0 0.0
    %1172 = vmatpush1.msra.mxu0 0.0
    %1173 = vmatprep.subr.mxu0 0.0
    %1174 = vmatpush1.msra.mxu0 0.0
    %1175 = vmatprep.subr.mxu0 0.0
    %1176 = vmatpush1.msra.mxu0 0.0
    %1177 = vmatprep.subr.mxu0 0.0
    %1178 = vmatpush1.msra.mxu0 0.0
    %1179 = vmatprep.subr.mxu0 0.0
    %1180 = vmatpush1.msra.mxu0 0.0
    %1181 = vmatprep.subr.mxu0 0.0
    %1182 = vmatpush1.msra.mxu0 0.0
    %1183 = vmatprep.subr.mxu0 0.0
    %1184 = vmatpush1.msra.mxu0 0.0
    %1185 = vmatprep.subr.mxu0 0.0
    %1186 = vmatpush1.msra.mxu0 0.0
    %1187 = vmatprep.subr.mxu0 0.0
    %1188 = vmatpush1.msra.mxu0 0.0
    %1189 = vmatprep.subr.mxu0 0.0
    %1190 = vmatpush1.msra.mxu0 0.0
    %1191 = vmatprep.subr.mxu0 0.0
    %1192 = vmatpush1.msra.mxu0 0.0
    %1193 = vmatprep.subr.mxu0 0.0
    %1194 = vmatpush1.msra.mxu0 0.0
    %1195 = vmatprep.subr.mxu0 0.0
    %1196 = vmatpush1.msra.mxu0 0.0
    %1197 = vmatprep.subr.mxu0 0.0
    %1198 = vmatpush1.msra.mxu0 0.0
    %1199 = vmatprep.subr.mxu0 0.0
    %1200 = vmatpush1.msra.mxu0 0.0
    %1201 = vmatprep.subr.mxu0 0.0
    %1202 = vmatpush1.msra.mxu0 0.0
    %1203 = vmatprep.subr.mxu0 0.0
    %1204 = vmatpush1.msra.mxu0 0.0
    %1205 = vmatprep.subr.mxu0 0.0
    %1206 = vmatpush1.msra.mxu0 0.0
    %1207 = vmatprep.subr.mxu0 0.0
    %1208 = vmatpush1.msra.mxu0 0.0
    %1209 = vmatprep.subr.mxu0 0.0
    %1210 = vmatpush1.msra.mxu0 0.0
    %1211 = vmatprep.subr.mxu0 0.0
    %1212 = vmatpush1.msra.mxu0 0.0
    %1213 = vmatprep.subr.mxu0 0.0
    %1214 = vmatpush1.msra.mxu0 0.0
    %1215 = vmatprep.subr.mxu0 0.0
    %1216 = vmatpush1.msra.mxu0 0.0
    %1217 = vmatprep.subr.mxu0 0.0
    %1218 = vmatpush1.msra.mxu0 0.0
    %1219 = vmatprep.subr.mxu0 0.0
    %1220 = vmatpush1.msra.mxu0 0.0
    %1221 = vmatprep.mubr.f32.mxu0 0.0
    %1222 = vmatmul.mubr.f32.gmra.mrb[0].mxu0 %v1152
    %v1223 = vpop.f32.mrb[0].mxu0
    %v1224 = vadd.f32 0.0, %v1223
    %v1225 = vpop.f32.mrb[0].mxu0
    %1226 = vmatprep.mubr.f32.mxu0 0.0
    %1227 = vmatmul.mubr.f32.gmra.mrb[0].mxu0 %v1155
    %v1228 = vpop.f32.mrb[0].mxu0
    %v1229 = vadd.f32 0.0, %v1228
    %v1230 = vpop.f32.mrb[0].mxu0
    %1231 = vdwg.mxu0
    %1232 = vrot.lane.b32.xlu0 %v551, 48
    %v1233 = vpop.permute.xlu0 %1232
    %1234 = vrot.lane.b32.xlu0 %v558, 48
    %v1235 = vpop.permute.xlu0 %1234
    %1238 = vrot.lane.b32.xlu0 %v634, 64
    %v1239 = vpop.permute.xlu0 %1238
    %1240 = vrot.lane.b32.xlu0 %v639, 64
    %v1241 = vpop.permute.xlu0 %1240
    %1244 = vrot.lane.b32.xlu0 %v719, 80
    %v1245 = vpop.permute.xlu0 %1244
    %1246 = vrot.lane.b32.xlu0 %v720, 80
    %v1247 = vpop.permute.xlu0 %1246
    %v1250 = vsel %vm472, %v1233, %v1239
    %v1251 = vsel %vm472, %v1235, %v1241
    %v1252 = vsel %vm739, %v1250, %v1245
    %v1253 = vsel %vm739, %v1251, %v1247
    %v1255 = vsel %vm748, %v1252, 0
    %v1258 = vsel %vm748, %v1253, 0
    %1260 = vmatprep.subr.mxu0 0.0
    %1261 = vmatpush1.msra.mxu0 %v742
    %1262 = vmatprep.subr.mxu0 0.0
    %1263 = vmatpush1.msra.mxu0 %v743
    %1264 = vmatprep.subr.mxu0 0.0
    %1265 = vmatpush1.msra.mxu0 %v744
    %1266 = vmatprep.subr.mxu0 0.0
    %1267 = vmatpush1.msra.mxu0 %v745
    %1268 = vmatprep.subr.mxu0 0.0
    %1269 = vmatpush1.msra.mxu0 %v746
    %1270 = vmatprep.subr.mxu0 0.0
    %1271 = vmatpush1.msra.mxu0 %v747
    %1272 = vmatprep.subr.mxu0 0.0
    %1273 = vmatpush1.msra.mxu0 0.0
    %1274 = vmatprep.subr.mxu0 0.0
    %1275 = vmatpush1.msra.mxu0 0.0
    %1276 = vmatprep.subr.mxu0 0.0
    %1277 = vmatpush1.msra.mxu0 0.0
    %1278 = vmatprep.subr.mxu0 0.0
    %1279 = vmatpush1.msra.mxu0 0.0
    %1280 = vmatprep.subr.mxu0 0.0
    %1281 = vmatpush1.msra.mxu0 0.0
    %1282 = vmatprep.subr.mxu0 0.0
    %1283 = vmatpush1.msra.mxu0 0.0
    %1284 = vmatprep.subr.mxu0 0.0
    %1285 = vmatpush1.msra.mxu0 0.0
    %1286 = vmatprep.subr.mxu0 0.0
    %1287 = vmatpush1.msra.mxu0 0.0
    %1288 = vmatprep.subr.mxu0 0.0
    %1289 = vmatpush1.msra.mxu0 0.0
    %1290 = vmatprep.subr.mxu0 0.0
    %1291 = vmatpush1.msra.mxu0 0.0
    %1292 = vmatprep.subr.mxu0 0.0
    %1293 = vmatpush1.msra.mxu0 0.0
    %1294 = vmatprep.subr.mxu0 0.0
    %1295 = vmatpush1.msra.mxu0 0.0
    %1296 = vmatprep.subr.mxu0 0.0
    %1297 = vmatpush1.msra.mxu0 0.0
    %1298 = vmatprep.subr.mxu0 0.0
    %1299 = vmatpush1.msra.mxu0 0.0
    %1300 = vmatprep.subr.mxu0 0.0
    %1301 = vmatpush1.msra.mxu0 0.0
    %1302 = vmatprep.subr.mxu0 0.0
    %1303 = vmatpush1.msra.mxu0 0.0
    %1304 = vmatprep.subr.mxu0 0.0
    %1305 = vmatpush1.msra.mxu0 0.0
    %1306 = vmatprep.subr.mxu0 0.0
    %1307 = vmatpush1.msra.mxu0 0.0
    %1308 = vmatprep.subr.mxu0 0.0
    %1309 = vmatpush1.msra.mxu0 0.0
    %1310 = vmatprep.subr.mxu0 0.0
    %1311 = vmatpush1.msra.mxu0 0.0
    %1312 = vmatprep.subr.mxu0 0.0
    %1313 = vmatpush1.msra.mxu0 0.0
    %1314 = vmatprep.subr.mxu0 0.0
    %1315 = vmatpush1.msra.mxu0 0.0
    %1316 = vmatprep.subr.mxu0 0.0
    %1317 = vmatpush1.msra.mxu0 0.0
    %1318 = vmatprep.subr.mxu0 0.0
    %1319 = vmatpush1.msra.mxu0 0.0
    %1320 = vmatprep.subr.mxu0 0.0
    %1321 = vmatpush1.msra.mxu0 0.0
    %1322 = vmatprep.subr.mxu0 0.0
    %1323 = vmatpush1.msra.mxu0 0.0
    %1324 = vmatprep.mubr.f32.mxu0 0.0
    %1325 = vmatmul.mubr.f32.gmra.mrb[0].mxu0 %v1255
    %v1326 = vpop.f32.mrb[0].mxu0
    %v1327 = vadd.f32 0.0, %v1326
    %v1328 = vpop.f32.mrb[0].mxu0
    %1329 = vmatprep.mubr.f32.mxu0 0.0
    %1330 = vmatmul.mubr.f32.gmra.mrb[0].mxu0 %v1258
    %v1331 = vpop.f32.mrb[0].mxu0
    %v1332 = vadd.f32 0.0, %v1331
    %v1333 = vpop.f32.mrb[0].mxu0
    %1334 = vdwg.mxu0
    %1335 = vrot.lane.b32.xlu0 %v551, 32
    %v1336 = vpop.permute.xlu0 %1335
    %1337 = vrot.lane.b32.xlu0 %v558, 32
    %v1338 = vpop.permute.xlu0 %1337
    %1341 = vrot.lane.b32.xlu0 %v634, 48
    %v1342 = vpop.permute.xlu0 %1341
    %1343 = vrot.lane.b32.xlu0 %v639, 48
    %v1344 = vpop.permute.xlu0 %1343
    %1347 = vrot.lane.b32.xlu0 %v719, 64
    %v1348 = vpop.permute.xlu0 %1347
    %1349 = vrot.lane.b32.xlu0 %v720, 64
    %v1350 = vpop.permute.xlu0 %1349
    %v1353 = vsel %vm472, %v1336, %v1342
    %v1354 = vsel %vm472, %v1338, %v1344
    %v1355 = vsel %vm739, %v1353, %v1348
    %v1356 = vsel %vm739, %v1354, %v1350
    %v1358 = vsel %vm748, %v1355, 0
    %v1361 = vsel %vm748, %v1356, 0
    %1363 = vmatprep.subr.mxu0 0.0
    %1364 = vmatpush1.msra.mxu0 %v742
    %1365 = vmatprep.subr.mxu0 0.0
    %1366 = vmatpush1.msra.mxu0 %v743
    %1367 = vmatprep.subr.mxu0 0.0
    %1368 = vmatpush1.msra.mxu0 %v744
    %1369 = vmatprep.subr.mxu0 0.0
    %1370 = vmatpush1.msra.mxu0 %v745
    %1371 = vmatprep.subr.mxu0 0.0
    %1372 = vmatpush1.msra.mxu0 %v746
    %1373 = vmatprep.subr.mxu0 0.0
    %1374 = vmatpush1.msra.mxu0 %v747
    %1375 = vmatprep.subr.mxu0 0.0
    %1376 = vmatpush1.msra.mxu0 0.0
    %1377 = vmatprep.subr.mxu0 0.0
    %1378 = vmatpush1.msra.mxu0 0.0
    %1379 = vmatprep.subr.mxu0 0.0
    %1380 = vmatpush1.msra.mxu0 0.0
    %1381 = vmatprep.subr.mxu0 0.0
    %1382 = vmatpush1.msra.mxu0 0.0
    %1383 = vmatprep.subr.mxu0 0.0
    %1384 = vmatpush1.msra.mxu0 0.0
    %1385 = vmatprep.subr.mxu0 0.0
    %1386 = vmatpush1.msra.mxu0 0.0
    %1387 = vmatprep.subr.mxu0 0.0
    %1388 = vmatpush1.msra.mxu0 0.0
    %1389 = vmatprep.subr.mxu0 0.0
    %1390 = vmatpush1.msra.mxu0 0.0
    %1391 = vmatprep.subr.mxu0 0.0
    %1392 = vmatpush1.msra.mxu0 0.0
    %1393 = vmatprep.subr.mxu0 0.0
    %1394 = vmatpush1.msra.mxu0 0.0
    %1395 = vmatprep.subr.mxu0 0.0
    %1396 = vmatpush1.msra.mxu0 0.0
    %1397 = vmatprep.subr.mxu0 0.0
    %1398 = vmatpush1.msra.mxu0 0.0
    %1399 = vmatprep.subr.mxu0 0.0
    %1400 = vmatpush1.msra.mxu0 0.0
    %1401 = vmatprep.subr.mxu0 0.0
    %1402 = vmatpush1.msra.mxu0 0.0
    %1403 = vmatprep.subr.mxu0 0.0
    %1404 = vmatpush1.msra.mxu0 0.0
    %1405 = vmatprep.subr.mxu0 0.0
    %1406 = vmatpush1.msra.mxu0 0.0
    %1407 = vmatprep.subr.mxu0 0.0
    %1408 = vmatpush1.msra.mxu0 0.0
    %1409 = vmatprep.subr.mxu0 0.0
    %1410 = vmatpush1.msra.mxu0 0.0
    %1411 = vmatprep.subr.mxu0 0.0
    %1412 = vmatpush1.msra.mxu0 0.0
    %1413 = vmatprep.subr.mxu0 0.0
    %1414 = vmatpush1.msra.mxu0 0.0
    %1415 = vmatprep.subr.mxu0 0.0
    %1416 = vmatpush1.msra.mxu0 0.0
    %1417 = vmatprep.subr.mxu0 0.0
    %1418 = vmatpush1.msra.mxu0 0.0
    %1419 = vmatprep.subr.mxu0 0.0
    %1420 = vmatpush1.msra.mxu0 0.0
    %1421 = vmatprep.subr.mxu0 0.0
    %1422 = vmatpush1.msra.mxu0 0.0
    %1423 = vmatprep.subr.mxu0 0.0
    %1424 = vmatpush1.msra.mxu0 0.0
    %1425 = vmatprep.subr.mxu0 0.0
    %1426 = vmatpush1.msra.mxu0 0.0
    %1427 = vmatprep.mubr.f32.mxu0 0.0
    %1428 = vmatmul.mubr.f32.gmra.mrb[0].mxu0 %v1358
    %v1429 = vpop.f32.mrb[0].mxu0
    %v1430 = vadd.f32 0.0, %v1429
    %v1431 = vpop.f32.mrb[0].mxu0
    %1432 = vmatprep.mubr.f32.mxu0 0.0
    %1433 = vmatmul.mubr.f32.gmra.mrb[0].mxu0 %v1361
    %v1434 = vpop.f32.mrb[0].mxu0
    %v1435 = vadd.f32 0.0, %v1434
    %v1436 = vpop.f32.mrb[0].mxu0
    %1437 = vdwg.mxu0
    %1440 = vrot.lane.b32.xlu0 %v921, 16
    %v1441 = vpop.permute.xlu0 %1440
    %1442 = vrot.lane.b32.xlu0 %v926, 16
    %v1443 = vpop.permute.xlu0 %1442
    %1448 = vrot.lane.b32.xlu0 %v1018, 32
    %v1449 = vpop.permute.xlu0 %1448
    %1450 = vrot.lane.b32.xlu0 %v1023, 32
    %v1451 = vpop.permute.xlu0 %1450
    %1456 = vrot.lane.b32.xlu0 %v1121, 48
    %v1457 = vpop.permute.xlu0 %1456
    %1458 = vrot.lane.b32.xlu0 %v1126, 48
    %v1459 = vpop.permute.xlu0 %1458
    %1464 = vrot.lane.b32.xlu0 %v1224, 64
    %v1465 = vpop.permute.xlu0 %1464
    %1466 = vrot.lane.b32.xlu0 %v1229, 64
    %v1467 = vpop.permute.xlu0 %1466
    %1472 = vrot.lane.b32.xlu0 %v1327, 80
    %v1473 = vpop.permute.xlu0 %1472
    %1474 = vrot.lane.b32.xlu0 %v1332, 80
    %v1475 = vpop.permute.xlu0 %1474
    %1480 = vrot.lane.b32.xlu0 %v1430, 96
    %v1481 = vpop.permute.xlu0 %1480
    %1482 = vrot.lane.b32.xlu0 %v1435, 96
    %v1483 = vpop.permute.xlu0 %1482
    %v1486 = vsel %vm472, %v822, %v1441
    %v1487 = vsel %vm472, %v827, %v1443
    %v1488 = vsel %vm739, %v1486, %v1449
    %v1489 = vsel %vm739, %v1487, %v1451
    %v1490 = vsel %vm748, %v1488, %v1457
    %v1491 = vsel %vm748, %v1489, %v1459
    %vm1492 = vcmask 523264
    %v1493 = vsel %vm1492, %v1490, %v1465
    %v1494 = vsel %vm1492, %v1491, %v1467
    %vm1495 = vcmask 654336
    %v1496 = vsel %vm1495, %v1493, %v1473
    %v1497 = vsel %vm1495, %v1494, %v1475
    %v1498 = vsel %vm75, %v1496, %v1481
    %v1499 = vsel %vm75, %v1497, %v1483
    %v1500 = vld [vmem:[%s7] sm:$0x1]
    %v1502 = vlaneseq
    %v1503 = vshrl.u32 %v1502, 7
    %v1504 = vsub.s32 0, %v1503
    %v1505 = vrot.slane %v1500, %v1504
    %v1507 = vadd.f32 %v1498, %v1505
    %v1508 = vadd.f32 %v1499, %v1505
    %v1509 = vadd.f32 %v1507, %v551
    %v1510 = vadd.f32 %v1508, %v558
    %v1511 = vmax.f32 %v1509, 0.0
    %v1512 = vmax.f32 %v1510, 0.0
    %v1514 = vrot.slane %v1511, 1
    %1515 = vrot.lane.b32.xlu0 %v1514, 112
    %v1516 = vpop.permute.xlu0 %1515
    %v1518 = vsel %vm67, %v1511, %v1516
    %v1520 = vrot.slane %v1518, 1
    %v1521 = vrot.slane %v1516, 1
    %v1524 = vrot.slane %v1518, 2
    %v1525 = vrot.slane %v1516, 2
    %v1528 = vrot.slane %v1518, 3
    %v1529 = vrot.slane %v1516, 3
    %v1532 = vsel %vm539, %v1518, %v1520
    %v1533 = vsel %vm539, %v1516, %v1521
    %v1534 = vsel %vm541, %v1532, %v1524
    %v1535 = vsel %vm541, %v1533, %v1525
    %v1536 = vsel %vm543, %v1534, %v1528
    %v1537 = vsel %vm543, %v1535, %v1529
    %v1540 = vrot.slane %v1536, 4
    %v1541 = vrot.slane %v1537, 4
    %1542 = vrot.lane.b32.xlu0 %v1540, 112
    %v1543 = vpop.permute.xlu0 %1542
    %1544 = vrot.lane.b32.xlu0 %v1541, 112
    %v1545 = vpop.permute.xlu0 %1544
    %v1546 = vsel %vm67, %v1543, %v1545
    %1549 = vrot.lane.b32.xlu0 %v1536, 96
    %v1550 = vpop.permute.xlu0 %1549
    %1551 = vrot.lane.b32.xlu0 %v1537, 96
    %v1552 = vpop.permute.xlu0 %1551
    %v1553 = vsel %vm75, %v1550, %v1552
    %v1554 = vsel %vm77, %v1536, %v1546
    %v1555 = vsel %vm77, %v1537, %v1545
    %v1556 = vld [vmem:[%s8] sm:$0xff]
    %v1557 = vld [vmem:[%s8 + $0x8] sm:$0xff]
    %v1558 = vld [vmem:[%s9] sm:$0xff]
    %v1559 = vld [vmem:[%s9 + $0x8] sm:$0xff]
    %1561 = vset.pattern.permute.xlu0 0
    %1562 = vperm.xlu0 %1561, %v1558
    %v1563 = vpop.permute.xlu0 %1562
    %1566 = vset.pattern.permute.xlu0 0
    %1567 = vperm.xlu0 %1566, %v1559
    %v1568 = vpop.permute.xlu0 %1567
    %v1571 = vsel %vm94, %v1556, 0
    %v1574 = vsel %vm94, %v1557, 0
    %v1576 = vsel %vm77, %v1553, 0
    %v1578 = vsel %vm77, %v1552, 0
    %1580 = vmatprep.subr.mxu0 %v1555
    %1581 = vmatpush1.msra.mxu0 %v1554
    %1582 = vmatprep.subr.mxu0 %v1578
    %1583 = vmatpush1.msra.mxu0 %v1576
    %1584 = vmatprep.subr.mxu0 0.0
    %1585 = vmatpush1.msra.mxu0 0.0
    %1586 = vmatprep.subr.mxu0 0.0
    %1587 = vmatpush1.msra.mxu0 0.0
    %1588 = vmatprep.subr.mxu0 0.0
    %1589 = vmatpush1.msra.mxu0 0.0
    %1590 = vmatprep.subr.mxu0 0.0
    %1591 = vmatpush1.msra.mxu0 0.0
    %1592 = vmatprep.subr.mxu0 0.0
    %1593 = vmatpush1.msra.mxu0 0.0
    %1594 = vmatprep.subr.mxu0 0.0
    %1595 = vmatpush1.msra.mxu0 0.0
    %1596 = vmatprep.subr.mxu0 0.0
    %1597 = vmatpush1.msra.mxu0 0.0
    %1598 = vmatprep.subr.mxu0 0.0
    %1599 = vmatpush1.msra.mxu0 0.0
    %1600 = vmatprep.subr.mxu0 0.0
    %1601 = vmatpush1.msra.mxu0 0.0
    %1602 = vmatprep.subr.mxu0 0.0
    %1603 = vmatpush1.msra.mxu0 0.0
    %1604 = vmatprep.subr.mxu0 0.0
    %1605 = vmatpush1.msra.mxu0 0.0
    %1606 = vmatprep.subr.mxu0 0.0
    %1607 = vmatpush1.msra.mxu0 0.0
    %1608 = vmatprep.subr.mxu0 0.0
    %1609 = vmatpush1.msra.mxu0 0.0
    %1610 = vmatprep.subr.mxu0 0.0
    %1611 = vmatpush1.msra.mxu0 0.0
    %1612 = vmatprep.subr.mxu0 0.0
    %1613 = vmatpush1.msra.mxu0 0.0
    %1614 = vmatprep.subr.mxu0 0.0
    %1615 = vmatpush1.msra.mxu0 0.0
    %1616 = vmatprep.subr.mxu0 0.0
    %1617 = vmatpush1.msra.mxu0 0.0
    %1618 = vmatprep.subr.mxu0 0.0
    %1619 = vmatpush1.msra.mxu0 0.0
    %1620 = vmatprep.subr.mxu0 0.0
    %1621 = vmatpush1.msra.mxu0 0.0
    %1622 = vmatprep.subr.mxu0 0.0
    %1623 = vmatpush1.msra.mxu0 0.0
    %1624 = vmatprep.subr.mxu0 0.0
    %1625 = vmatpush1.msra.mxu0 0.0
    %1626 = vmatprep.subr.mxu0 0.0
    %1627 = vmatpush1.msra.mxu0 0.0
    %1628 = vmatprep.subr.mxu0 0.0
    %1629 = vmatpush1.msra.mxu0 0.0
    %1630 = vmatprep.subr.mxu0 0.0
    %1631 = vmatpush1.msra.mxu0 0.0
    %1632 = vmatprep.subr.mxu0 0.0
    %1633 = vmatpush1.msra.mxu0 0.0
    %1634 = vmatprep.subr.mxu0 0.0
    %1635 = vmatpush1.msra.mxu0 0.0
    %1636 = vmatprep.subr.mxu0 0.0
    %1637 = vmatpush1.msra.mxu0 0.0
    %1638 = vmatprep.subr.mxu0 0.0
    %1639 = vmatpush1.msra.mxu0 0.0
    %1640 = vmatprep.subr.mxu0 0.0
    %1641 = vmatpush1.msra.mxu0 0.0
    %1642 = vmatprep.subr.mxu0 0.0
    %1643 = vmatpush1.msra.mxu0 0.0
    %1644 = vmatprep.mubr.f32.mxu0 0.0
    %1645 = vmatmul.mubr.f32.gmra.mrb[0].mxu0 %v1571
    %v1646 = vpop.f32.mrb[0].mxu0
    %v1647 = vadd.f32 %v1563, %v1646
    %v1648 = vpop.f32.mrb[0].mxu0
    %v1649 = vadd.f32 %v1563, %v1648
    %1650 = vmatprep.mubr.f32.mxu0 0.0
    %1651 = vmatmul.mubr.f32.gmra.mrb[0].mxu0 %v1574
    %v1652 = vpop.f32.mrb[0].mxu0
    %v1653 = vadd.f32 %v1568, %v1652
    %v1654 = vpop.f32.mrb[0].mxu0
    %v1655 = vadd.f32 %v1568, %v1654
    %1656 = vdwg.mxu0
    %v1657 = vxor.u32 %v1653, 2147483648
    %v1658 = vxor.u32 %v1655, 2147483648
    %v1659 = vmul.f32 %v1657, 1.442695
    %v1660 = vpow.pop %v1659
    %v1661 = vmul.f32 %v1658, 1.442695
    %v1662 = vpow.pop %v1661
    %v1663 = vadd.f32 %v1660, 1.0
    %v1664 = vadd.f32 %v1662, 1.0
    %v1665 = vrcp.pop %v1663
    %v1666 = vmul.f32 1.0, %v1665
    %v1667 = vrcp.pop %v1664
    %v1668 = vmul.f32 1.0, %v1667
    %v1669 = vmul.f32 %v1647, %v1666
    %v1670 = vmul.f32 %v1649, %v1668
    %v1671 = vrot.slane %v1669, 4
    %v1672 = vadd.f32 %v1669, %v1671
    %v1673 = vrot.slane %v1672, 2
    %v1674 = vadd.f32 %v1672, %v1673
    %v1675 = vrot.slane %v1674, 1
    %v1676 = vadd.f32 %v1674, %v1675
    %v1677 = vsel %vm1492, %v1670, 0.0
    %v1678 = vrot.slane %v1677, 4
    %v1679 = vadd.f32 %v1677, %v1678
    %v1680 = vrot.slane %v1679, 2
    %v1681 = vadd.f32 %v1679, %v1680
    %v1682 = vrot.slane %v1681, 1
    %v1683 = vadd.f32 %v1681, %v1682
    %v1684 = vmul.f32 %v1669, %v1669
    %v1685 = vmul.f32 %v1670, %v1670
    %v1686 = vrot.slane %v1684, 4
    %v1687 = vadd.f32 %v1684, %v1686
    %v1688 = vrot.slane %v1687, 2
    %v1689 = vadd.f32 %v1687, %v1688
    %v1690 = vrot.slane %v1689, 1
    %v1691 = vadd.f32 %v1689, %v1690
    %v1692 = vsel %vm1492, %v1685, 0.0
    %v1693 = vrot.slane %v1692, 4
    %v1694 = vadd.f32 %v1692, %v1693
    %v1695 = vrot.slane %v1694, 2
    %v1696 = vadd.f32 %v1694, %v1695
    %v1697 = vrot.slane %v1696, 1
    %v1698 = vadd.f32 %v1696, %v1697
    %v1699 = vld [vmem:[#allocation2] sm:$0xff]
    %v1700 = vld [vmem:[#allocation2 + $0x8] sm:$0xff]
    %v1701 = vld [vmem:[#allocation2 + $0x10] sm:$0xff]
    %v1702 = vld [vmem:[#allocation2 + $0x18] sm:$0xff]
    %v1703 = vld [vmem:[#allocation2 + $0x20] sm:$0xff]
    %v1704 = vld [vmem:[#allocation2 + $0x28] sm:$0xff]
    %v1705 = vld [vmem:[#allocation2 + $0x30] sm:$0xff]
    %v1706 = vld [vmem:[#allocation2 + $0x38] sm:$0xff]
    %v1707 = vld [vmem:[#allocation2 + $0x40] sm:$0xff]
    %v1708 = vld [vmem:[#allocation2 + $0x48] sm:$0xff]
    %v1709 = vld [vmem:[#allocation2 + $0x50] sm:$0xff]
    %v1710 = vld [vmem:[#allocation2 + $0x58] sm:$0xff]
    %v1711 = vld [vmem:[#allocation2 + $0x60] sm:$0xff]
    %v1712 = vld [vmem:[#allocation2 + $0x68] sm:$0xff]
    %v1713 = vld [vmem:[#allocation2 + $0x70] sm:$0xff]
    %v1714 = vld [vmem:[#allocation2 + $0x78] sm:$0xff]
    %v1715 = vld [vmem:[#allocation2 + $0x80] sm:$0xff]
    %v1716 = vld [vmem:[#allocation2 + $0x88] sm:$0xff]
    %v1717 = vld [vmem:[#allocation2 + $0x90] sm:$0xff]
    %v1718 = vld [vmem:[#allocation2 + $0x98] sm:$0xff]
    %v1719 = vld [vmem:[#allocation2 + $0xa0] sm:$0xff]
    %v1720 = vld [vmem:[#allocation2 + $0xa8] sm:$0xff]
    %v1721 = vld [vmem:[#allocation2 + $0xb0] sm:$0xff]
    %v1722 = vld [vmem:[#allocation2 + $0xb8] sm:$0xff]
    %v1723 = vld [vmem:[#allocation2 + $0xc0] sm:$0xff]
    %v1724 = vld [vmem:[#allocation2 + $0xc8] sm:$0xff]
    %v1725 = vld [vmem:[#allocation2 + $0xd0] sm:$0xff]
    %v1726 = vld [vmem:[#allocation2 + $0xd8] sm:$0xff]
    %v1727 = vld [vmem:[#allocation2 + $0xe0] sm:$0xff]
    %v1728 = vld [vmem:[#allocation2 + $0xe8] sm:$0xff]
    %v1729 = vld [vmem:[#allocation2 + $0xf0] sm:$0xff]
    %v1730 = vld [vmem:[#allocation2 + $0xf8] sm:$0xff]
    %v1731 = vld [vmem:[#allocation2 + $0x100] sm:$0xff]
    %v1732 = vld [vmem:[#allocation2 + $0x108] sm:$0xff]
    %v1733 = vld [vmem:[#allocation2 + $0x110] sm:$0xff]
    %v1734 = vld [vmem:[#allocation2 + $0x118] sm:$0xff]
    %v1735 = vld [vmem:[#allocation2 + $0x120] sm:$0xff]
    %v1736 = vld [vmem:[#allocation2 + $0x128] sm:$0xff]
    %v1737 = vld [vmem:[#allocation2 + $0x130] sm:$0xff]
    %v1738 = vld [vmem:[#allocation2 + $0x138] sm:$0xff]
    %v1739 = vld [vmem:[#allocation2 + $0x140] sm:$0xff]
    %v1740 = vld [vmem:[#allocation2 + $0x148] sm:$0xff]
    %v1741 = vld [vmem:[#allocation2 + $0x150] sm:$0xff]
    %v1742 = vld [vmem:[#allocation2 + $0x158] sm:$0xff]
    %v1743 = vld [vmem:[#allocation2 + $0x160] sm:$0xff]
    %v1744 = vld [vmem:[#allocation2 + $0x168] sm:$0xff]
    %v1745 = vld [vmem:[#allocation2 + $0x170] sm:$0xff]
    %v1746 = vld [vmem:[#allocation2 + $0x178] sm:$0xff]
    %v1748 = vsel %vm1492, %v1683, 0
    %1750 = vmatprep.subr.mxu0 %v1700
    %1751 = vmatpush1.msra.mxu0 %v1699
    %1752 = vmatprep.subr.mxu0 %v1702
    %1753 = vmatpush1.msra.mxu0 %v1701
    %1754 = vmatprep.subr.mxu0 %v1704
    %1755 = vmatpush1.msra.mxu0 %v1703
    %1756 = vmatprep.subr.mxu0 %v1706
    %1757 = vmatpush1.msra.mxu0 %v1705
    %1758 = vmatprep.subr.mxu0 %v1708
    %1759 = vmatpush1.msra.mxu0 %v1707
    %1760 = vmatprep.subr.mxu0 %v1710
    %1761 = vmatpush1.msra.mxu0 %v1709
    %1762 = vmatprep.subr.mxu0 %v1712
    %1763 = vmatpush1.msra.mxu0 %v1711
    %1764 = vmatprep.subr.mxu0 %v1714
    %1765 = vmatpush1.msra.mxu0 %v1713
    %1766 = vmatprep.subr.mxu0 %v1716
    %1767 = vmatpush1.msra.mxu0 %v1715
    %1768 = vmatprep.subr.mxu0 %v1718
    %1769 = vmatpush1.msra.mxu0 %v1717
    %1770 = vmatprep.subr.mxu0 %v1720
    %1771 = vmatpush1.msra.mxu0 %v1719
    %1772 = vmatprep.subr.mxu0 %v1722
    %1773 = vmatpush1.msra.mxu0 %v1721
    %1774 = vmatprep.subr.mxu0 %v1724
    %1775 = vmatpush1.msra.mxu0 %v1723
    %1776 = vmatprep.subr.mxu0 %v1726
    %1777 = vmatpush1.msra.mxu0 %v1725
    %1778 = vmatprep.subr.mxu0 %v1728
    %1779 = vmatpush1.msra.mxu0 %v1727
    %1780 = vmatprep.subr.mxu0 %v1730
    %1781 = vmatpush1.msra.mxu0 %v1729
    %1782 = vmatprep.subr.mxu0 %v1732
    %1783 = vmatpush1.msra.mxu0 %v1731
    %1784 = vmatprep.subr.mxu0 %v1734
    %1785 = vmatpush1.msra.mxu0 %v1733
    %1786 = vmatprep.subr.mxu0 %v1736
    %1787 = vmatpush1.msra.mxu0 %v1735
    %1788 = vmatprep.subr.mxu0 %v1738
    %1789 = vmatpush1.msra.mxu0 %v1737
    %1790 = vmatprep.subr.mxu0 %v1740
    %1791 = vmatpush1.msra.mxu0 %v1739
    %1792 = vmatprep.subr.mxu0 %v1742
    %1793 = vmatpush1.msra.mxu0 %v1741
    %1794 = vmatprep.subr.mxu0 %v1744
    %1795 = vmatpush1.msra.mxu0 %v1743
    %1796 = vmatprep.subr.mxu0 %v1746
    %1797 = vmatpush1.msra.mxu0 %v1745
    %1798 = vmatprep.subr.mxu0 0.0
    %1799 = vmatpush1.msra.mxu0 0.0
    %1800 = vmatprep.subr.mxu0 0.0
    %1801 = vmatpush1.msra.mxu0 0.0
    %1802 = vmatprep.subr.mxu0 0.0
    %1803 = vmatpush1.msra.mxu0 0.0
    %1804 = vmatprep.subr.mxu0 0.0
    %1805 = vmatpush1.msra.mxu0 0.0
    %1806 = vmatprep.subr.mxu0 0.0
    %1807 = vmatpush1.msra.mxu0 0.0
    %1808 = vmatprep.subr.mxu0 0.0
    %1809 = vmatpush1.msra.mxu0 0.0
    %1810 = vmatprep.subr.mxu0 0.0
    %1811 = vmatpush1.msra.mxu0 0.0
    %1812 = vmatprep.subr.mxu0 0.0
    %1813 = vmatpush1.msra.mxu0 0.0
    %1814 = vmatprep.mubr.f32.mxu0 %v1748
    %1815 = vmatmul.mubr.f32.gmra.mrb[0].mxu0 %v1676
    %v1816 = vpop.f32.mrb[0].mxu0
    %v1817 = vadd.f32 0.0, %v1816
    %v1818 = vpop.f32.mrb[0].mxu0
    %v1819 = vadd.f32 0.0, %v1818
    %1820 = vdwg.mxu0
    %v1822 = vsel %vm1492, %v1698, 0
    %1824 = vmatprep.subr.mxu0 %v1700
    %1825 = vmatpush1.msra.mxu0 %v1699
    %1826 = vmatprep.subr.mxu0 %v1702
    %1827 = vmatpush1.msra.mxu0 %v1701
    %1828 = vmatprep.subr.mxu0 %v1704
    %1829 = vmatpush1.msra.mxu0 %v1703
    %1830 = vmatprep.subr.mxu0 %v1706
    %1831 = vmatpush1.msra.mxu0 %v1705
    %1832 = vmatprep.subr.mxu0 %v1708
    %1833 = vmatpush1.msra.mxu0 %v1707
    %1834 = vmatprep.subr.mxu0 %v1710
    %1835 = vmatpush1.msra.mxu0 %v1709
    %1836 = vmatprep.subr.mxu0 %v1712
    %1837 = vmatpush1.msra.mxu0 %v1711
    %1838 = vmatprep.subr.mxu0 %v1714
    %1839 = vmatpush1.msra.mxu0 %v1713
    %1840 = vmatprep.subr.mxu0 %v1716
    %1841 = vmatpush1.msra.mxu0 %v1715
    %1842 = vmatprep.subr.mxu0 %v1718
    %1843 = vmatpush1.msra.mxu0 %v1717
    %1844 = vmatprep.subr.mxu0 %v1720
    %1845 = vmatpush1.msra.mxu0 %v1719
    %1846 = vmatprep.subr.mxu0 %v1722
    %1847 = vmatpush1.msra.mxu0 %v1721
    %1848 = vmatprep.subr.mxu0 %v1724
    %1849 = vmatpush1.msra.mxu0 %v1723
    %1850 = vmatprep.subr.mxu0 %v1726
    %1851 = vmatpush1.msra.mxu0 %v1725
    %1852 = vmatprep.subr.mxu0 %v1728
    %1853 = vmatpush1.msra.mxu0 %v1727
    %1854 = vmatprep.subr.mxu0 %v1730
    %1855 = vmatpush1.msra.mxu0 %v1729
    %1856 = vmatprep.subr.mxu0 %v1732
    %1857 = vmatpush1.msra.mxu0 %v1731
    %1858 = vmatprep.subr.mxu0 %v1734
    %1859 = vmatpush1.msra.mxu0 %v1733
    %1860 = vmatprep.subr.mxu0 %v1736
    %1861 = vmatpush1.msra.mxu0 %v1735
    %1862 = vmatprep.subr.mxu0 %v1738
    %1863 = vmatpush1.msra.mxu0 %v1737
    %1864 = vmatprep.subr.mxu0 %v1740
    %1865 = vmatpush1.msra.mxu0 %v1739
    %1866 = vmatprep.subr.mxu0 %v1742
    %1867 = vmatpush1.msra.mxu0 %v1741
    %1868 = vmatprep.subr.mxu0 %v1744
    %1869 = vmatpush1.msra.mxu0 %v1743
    %1870 = vmatprep.subr.mxu0 %v1746
    %1871 = vmatpush1.msra.mxu0 %v1745
    %1872 = vmatprep.subr.mxu0 0.0
    %1873 = vmatpush1.msra.mxu0 0.0
    %1874 = vmatprep.subr.mxu0 0.0
    %1875 = vmatpush1.msra.mxu0 0.0
    %1876 = vmatprep.subr.mxu0 0.0
    %1877 = vmatpush1.msra.mxu0 0.0
    %1878 = vmatprep.subr.mxu0 0.0
    %1879 = vmatpush1.msra.mxu0 0.0
    %1880 = vmatprep.subr.mxu0 0.0
    %1881 = vmatpush1.msra.mxu0 0.0
    %1882 = vmatprep.subr.mxu0 0.0
    %1883 = vmatpush1.msra.mxu0 0.0
    %1884 = vmatprep.subr.mxu0 0.0
    %1885 = vmatpush1.msra.mxu0 0.0
    %1886 = vmatprep.subr.mxu0 0.0
    %1887 = vmatpush1.msra.mxu0 0.0
    %1888 = vmatprep.mubr.f32.mxu0 %v1822
    %1889 = vmatmul.mubr.f32.gmra.mrb[0].mxu0 %v1691
    %v1890 = vpop.f32.mrb[0].mxu0
    %v1891 = vadd.f32 0.0, %v1890
    %v1892 = vpop.f32.mrb[0].mxu0
    %v1893 = vadd.f32 0.0, %v1892
    %1894 = vdwg.mxu0
    %v1895 = vmul.f32 %v1817, %v1817
    %v1896 = vmul.f32 %v1819, %v1819
    %v1897 = vsub.f32 %v1891, %v1895
    %v1898 = vsub.f32 %v1893, %v1896
    %v1899 = vlaneseq
    %v1900 = vshrl.u32 %v1899, 7
    %v1901 = vsub.s32 0, %v1900
    %v1902 = vrot.slane %v1817, %v1901
    %v1903 = vlaneseq
    %v1904 = vshrl.u32 %v1903, 7
    %v1905 = vsub.s32 0, %v1904
    %v1906 = vrot.slane %v1819, %v1905
    %v1907 = vsub.f32 %v1669, %v1902
    %v1908 = vsub.f32 %v1670, %v1906
    %v1909 = vadd.f32 %v1897, 1e-05
    %v1910 = vadd.f32 %v1898, 1e-05
    %v1911 = vrsqrt.pop %v1909
    %v1912 = vrsqrt.pop %v1910
    %v1913 = vlaneseq
    %v1914 = vshrl.u32 %v1913, 7
    %v1915 = vsub.s32 0, %v1914
    %v1916 = vrot.slane %v1911, %v1915
    %v1917 = vlaneseq
    %v1918 = vshrl.u32 %v1917, 7
    %v1919 = vsub.s32 0, %v1918
    %v1920 = vrot.slane %v1912, %v1919
    %v1921 = vmul.f32 %v1907, %v1916
    %v1922 = vmul.f32 %v1908, %v1920
    %v1923 = vld [vmem:[%s11] sm:$0xff]
    %v1924 = vld [vmem:[%s11 + $0x8] sm:$0xff]
    %v1925 = vmul.f32 %v1921, %v1923
    %v1926 = vmul.f32 %v1922, %v1924
    %v1927 = vld [vmem:[%s12] sm:$0xff]
    %v1928 = vld [vmem:[%s12 + $0x8] sm:$0xff]
    %v1929 = vadd.f32 %v1925, %v1927
    %v1930 = vadd.f32 %v1926, %v1928
    %1931 = vst [vmem:[%s13] sm:$0xff] %v1929
    %1932 = vst.msk [vmem:[%s13 + $0x8] sm:$0xff] %vm1492, %v1930
    %v1934 = vrot.slane %v1512, 1
    %1935 = vrot.lane.b32.xlu0 %v1934, 112
    %v1936 = vpop.permute.xlu0 %1935
    %v1938 = vsel %vm67, %v1512, %v1936
    %v1940 = vrot.slane %v1938, 1
    %v1941 = vrot.slane %v1936, 1
    %v1944 = vrot.slane %v1938, 2
    %v1945 = vrot.slane %v1936, 2
    %v1948 = vrot.slane %v1938, 3
    %v1949 = vrot.slane %v1936, 3
    %v1952 = vsel %vm539, %v1938, %v1940
    %v1953 = vsel %vm539, %v1936, %v1941
    %v1954 = vsel %vm541, %v1952, %v1944
    %v1955 = vsel %vm541, %v1953, %v1945
    %v1956 = vsel %vm543, %v1954, %v1948
    %v1957 = vsel %vm543, %v1955, %v1949
    %v1960 = vrot.slane %v1956, 4
    %v1961 = vrot.slane %v1957, 4
    %1962 = vrot.lane.b32.xlu0 %v1960, 112
    %v1963 = vpop.permute.xlu0 %1962
    %1964 = vrot.lane.b32.xlu0 %v1961, 112
    %v1965 = vpop.permute.xlu0 %1964
    %v1966 = vsel %vm67, %v1963, %v1965
    %1969 = vrot.lane.b32.xlu0 %v1956, 96
    %v1970 = vpop.permute.xlu0 %1969
    %1971 = vrot.lane.b32.xlu0 %v1957, 96
    %v1972 = vpop.permute.xlu0 %1971
    %v1973 = vsel %vm75, %v1970, %v1972
    %v1974 = vsel %vm77, %v1956, %v1966
    %v1975 = vsel %vm77, %v1957, %v1965
    %v1976 = vld [vmem:[%s8] sm:$0xff]
    %v1977 = vld [vmem:[%s8 + $0x8] sm:$0xff]
    %v1978 = vld [vmem:[%s9] sm:$0xff]
    %v1979 = vld [vmem:[%s9 + $0x8] sm:$0xff]
    %1981 = vset.pattern.permute.xlu0 0
    %1982 = vperm.xlu0 %1981, %v1978
    %v1983 = vpop.permute.xlu0 %1982
    %1986 = vset.pattern.permute.xlu0 0
    %1987 = vperm.xlu0 %1986, %v1979
    %v1988 = vpop.permute.xlu0 %1987
    %v1991 = vsel %vm94, %v1976, 0
    %v1994 = vsel %vm94, %v1977, 0
    %v1996 = vsel %vm77, %v1973, 0
    %v1998 = vsel %vm77, %v1972, 0
    %2000 = vmatprep.subr.mxu0 %v1975
    %2001 = vmatpush1.msra.mxu0 %v1974
    %2002 = vmatprep.subr.mxu0 %v1998
    %2003 = vmatpush1.msra.mxu0 %v1996
    %2004 = vmatprep.subr.mxu0 0.0
    %2005 = vmatpush1.msra.mxu0 0.0
    %2006 = vmatprep.subr.mxu0 0.0
    %2007 = vmatpush1.msra.mxu0 0.0
    %2008 = vmatprep.subr.mxu0 0.0
    %2009 = vmatpush1.msra.mxu0 0.0
    %2010 = vmatprep.subr.mxu0 0.0
    %2011 = vmatpush1.msra.mxu0 0.0
    %2012 = vmatprep.subr.mxu0 0.0
    %2013 = vmatpush1.msra.mxu0 0.0
    %2014 = vmatprep.subr.mxu0 0.0
    %2015 = vmatpush1.msra.mxu0 0.0
    %2016 = vmatprep.subr.mxu0 0.0
    %2017 = vmatpush1.msra.mxu0 0.0
    %2018 = vmatprep.subr.mxu0 0.0
    %2019 = vmatpush1.msra.mxu0 0.0
    %2020 = vmatprep.subr.mxu0 0.0
    %2021 = vmatpush1.msra.mxu0 0.0
    %2022 = vmatprep.subr.mxu0 0.0
    %2023 = vmatpush1.msra.mxu0 0.0
    %2024 = vmatprep.subr.mxu0 0.0
    %2025 = vmatpush1.msra.mxu0 0.0
    %2026 = vmatprep.subr.mxu0 0.0
    %2027 = vmatpush1.msra.mxu0 0.0
    %2028 = vmatprep.subr.mxu0 0.0
    %2029 = vmatpush1.msra.mxu0 0.0
    %2030 = vmatprep.subr.mxu0 0.0
    %2031 = vmatpush1.msra.mxu0 0.0
    %2032 = vmatprep.subr.mxu0 0.0
    %2033 = vmatpush1.msra.mxu0 0.0
    %2034 = vmatprep.subr.mxu0 0.0
    %2035 = vmatpush1.msra.mxu0 0.0
    %2036 = vmatprep.subr.mxu0 0.0
    %2037 = vmatpush1.msra.mxu0 0.0
    %2038 = vmatprep.subr.mxu0 0.0
    %2039 = vmatpush1.msra.mxu0 0.0
    %2040 = vmatprep.subr.mxu0 0.0
    %2041 = vmatpush1.msra.mxu0 0.0
    %2042 = vmatprep.subr.mxu0 0.0
    %2043 = vmatpush1.msra.mxu0 0.0
    %2044 = vmatprep.subr.mxu0 0.0
    %2045 = vmatpush1.msra.mxu0 0.0
    %2046 = vmatprep.subr.mxu0 0.0
    %2047 = vmatpush1.msra.mxu0 0.0
    %2048 = vmatprep.subr.mxu0 0.0
    %2049 = vmatpush1.msra.mxu0 0.0
    %2050 = vmatprep.subr.mxu0 0.0
    %2051 = vmatpush1.msra.mxu0 0.0
    %2052 = vmatprep.subr.mxu0 0.0
    %2053 = vmatpush1.msra.mxu0 0.0
    %2054 = vmatprep.subr.mxu0 0.0
    %2055 = vmatpush1.msra.mxu0 0.0
    %2056 = vmatprep.subr.mxu0 0.0
    %2057 = vmatpush1.msra.mxu0 0.0
    %2058 = vmatprep.subr.mxu0 0.0
    %2059 = vmatpush1.msra.mxu0 0.0
    %2060 = vmatprep.subr.mxu0 0.0
    %2061 = vmatpush1.msra.mxu0 0.0
    %2062 = vmatprep.subr.mxu0 0.0
    %2063 = vmatpush1.msra.mxu0 0.0
    %2064 = vmatprep.mubr.f32.mxu0 0.0
    %2065 = vmatmul.mubr.f32.gmra.mrb[0].mxu0 %v1991
    %v2066 = vpop.f32.mrb[0].mxu0
    %v2067 = vadd.f32 %v1983, %v2066
    %v2068 = vpop.f32.mrb[0].mxu0
    %v2069 = vadd.f32 %v1983, %v2068
    %2070 = vmatprep.mubr.f32.mxu0 0.0
    %2071 = vmatmul.mubr.f32.gmra.mrb[0].mxu0 %v1994
    %v2072 = vpop.f32.mrb[0].mxu0
    %v2073 = vadd.f32 %v1988, %v2072
    %v2074 = vpop.f32.mrb[0].mxu0
    %v2075 = vadd.f32 %v1988, %v2074
    %2076 = vdwg.mxu0
    %v2077 = vxor.u32 %v2073, 2147483648
    %v2078 = vxor.u32 %v2075, 2147483648
    %v2079 = vmul.f32 %v2077, 1.442695
    %v2080 = vpow.pop %v2079
    %v2081 = vmul.f32 %v2078, 1.442695
    %v2082 = vpow.pop %v2081
    %v2083 = vadd.f32 %v2080, 1.0
    %v2084 = vadd.f32 %v2082, 1.0
    %v2085 = vrcp.pop %v2083
    %v2086 = vmul.f32 1.0, %v2085
    %v2087 = vrcp.pop %v2084
    %v2088 = vmul.f32 1.0, %v2087
    %v2089 = vmul.f32 %v2067, %v2086
    %v2090 = vmul.f32 %v2069, %v2088
    %v2091 = vrot.slane %v2089, 4
    %v2092 = vadd.f32 %v2089, %v2091
    %v2093 = vrot.slane %v2092, 2
    %v2094 = vadd.f32 %v2092, %v2093
    %v2095 = vrot.slane %v2094, 1
    %v2096 = vadd.f32 %v2094, %v2095
    %v2097 = vsel %vm1492, %v2090, 0.0
    %v2098 = vrot.slane %v2097, 4
    %v2099 = vadd.f32 %v2097, %v2098
    %v2100 = vrot.slane %v2099, 2
    %v2101 = vadd.f32 %v2099, %v2100
    %v2102 = vrot.slane %v2101, 1
    %v2103 = vadd.f32 %v2101, %v2102
    %v2104 = vmul.f32 %v2089, %v2089
    %v2105 = vmul.f32 %v2090, %v2090
    %v2106 = vrot.slane %v2104, 4
    %v2107 = vadd.f32 %v2104, %v2106
    %v2108 = vrot.slane %v2107, 2
    %v2109 = vadd.f32 %v2107, %v2108
    %v2110 = vrot.slane %v2109, 1
    %v2111 = vadd.f32 %v2109, %v2110
    %v2112 = vsel %vm1492, %v2105, 0.0
    %v2113 = vrot.slane %v2112, 4
    %v2114 = vadd.f32 %v2112, %v2113
    %v2115 = vrot.slane %v2114, 2
    %v2116 = vadd.f32 %v2114, %v2115
    %v2117 = vrot.slane %v2116, 1
    %v2118 = vadd.f32 %v2116, %v2117
    %v2119 = vld [vmem:[#allocation2] sm:$0xff]
    %v2120 = vld [vmem:[#allocation2 + $0x8] sm:$0xff]
    %v2121 = vld [vmem:[#allocation2 + $0x10] sm:$0xff]
    %v2122 = vld [vmem:[#allocation2 + $0x18] sm:$0xff]
    %v2123 = vld [vmem:[#allocation2 + $0x20] sm:$0xff]
    %v2124 = vld [vmem:[#allocation2 + $0x28] sm:$0xff]
    %v2125 = vld [vmem:[#allocation2 + $0x30] sm:$0xff]
    %v2126 = vld [vmem:[#allocation2 + $0x38] sm:$0xff]
    %v2127 = vld [vmem:[#allocation2 + $0x40] sm:$0xff]
    %v2128 = vld [vmem:[#allocation2 + $0x48] sm:$0xff]
    %v2129 = vld [vmem:[#allocation2 + $0x50] sm:$0xff]
    %v2130 = vld [vmem:[#allocation2 + $0x58] sm:$0xff]
    %v2131 = vld [vmem:[#allocation2 + $0x60] sm:$0xff]
    %v2132 = vld [vmem:[#allocation2 + $0x68] sm:$0xff]
    %v2133 = vld [vmem:[#allocation2 + $0x70] sm:$0xff]
    %v2134 = vld [vmem:[#allocation2 + $0x78] sm:$0xff]
    %v2135 = vld [vmem:[#allocation2 + $0x80] sm:$0xff]
    %v2136 = vld [vmem:[#allocation2 + $0x88] sm:$0xff]
    %v2137 = vld [vmem:[#allocation2 + $0x90] sm:$0xff]
    %v2138 = vld [vmem:[#allocation2 + $0x98] sm:$0xff]
    %v2139 = vld [vmem:[#allocation2 + $0xa0] sm:$0xff]
    %v2140 = vld [vmem:[#allocation2 + $0xa8] sm:$0xff]
    %v2141 = vld [vmem:[#allocation2 + $0xb0] sm:$0xff]
    %v2142 = vld [vmem:[#allocation2 + $0xb8] sm:$0xff]
    %v2143 = vld [vmem:[#allocation2 + $0xc0] sm:$0xff]
    %v2144 = vld [vmem:[#allocation2 + $0xc8] sm:$0xff]
    %v2145 = vld [vmem:[#allocation2 + $0xd0] sm:$0xff]
    %v2146 = vld [vmem:[#allocation2 + $0xd8] sm:$0xff]
    %v2147 = vld [vmem:[#allocation2 + $0xe0] sm:$0xff]
    %v2148 = vld [vmem:[#allocation2 + $0xe8] sm:$0xff]
    %v2149 = vld [vmem:[#allocation2 + $0xf0] sm:$0xff]
    %v2150 = vld [vmem:[#allocation2 + $0xf8] sm:$0xff]
    %v2151 = vld [vmem:[#allocation2 + $0x100] sm:$0xff]
    %v2152 = vld [vmem:[#allocation2 + $0x108] sm:$0xff]
    %v2153 = vld [vmem:[#allocation2 + $0x110] sm:$0xff]
    %v2154 = vld [vmem:[#allocation2 + $0x118] sm:$0xff]
    %v2155 = vld [vmem:[#allocation2 + $0x120] sm:$0xff]
    %v2156 = vld [vmem:[#allocation2 + $0x128] sm:$0xff]
    %v2157 = vld [vmem:[#allocation2 + $0x130] sm:$0xff]
    %v2158 = vld [vmem:[#allocation2 + $0x138] sm:$0xff]
    %v2159 = vld [vmem:[#allocation2 + $0x140] sm:$0xff]
    %v2160 = vld [vmem:[#allocation2 + $0x148] sm:$0xff]
    %v2161 = vld [vmem:[#allocation2 + $0x150] sm:$0xff]
    %v2162 = vld [vmem:[#allocation2 + $0x158] sm:$0xff]
    %v2163 = vld [vmem:[#allocation2 + $0x160] sm:$0xff]
    %v2164 = vld [vmem:[#allocation2 + $0x168] sm:$0xff]
    %v2165 = vld [vmem:[#allocation2 + $0x170] sm:$0xff]
    %v2166 = vld [vmem:[#allocation2 + $0x178] sm:$0xff]
    %v2168 = vsel %vm1492, %v2103, 0
    %2170 = vmatprep.subr.mxu0 %v2120
    %2171 = vmatpush1.msra.mxu0 %v2119
    %2172 = vmatprep.subr.mxu0 %v2122
    %2173 = vmatpush1.msra.mxu0 %v2121
    %2174 = vmatprep.subr.mxu0 %v2124
    %2175 = vmatpush1.msra.mxu0 %v2123
    %2176 = vmatprep.subr.mxu0 %v2126
    %2177 = vmatpush1.msra.mxu0 %v2125
    %2178 = vmatprep.subr.mxu0 %v2128
    %2179 = vmatpush1.msra.mxu0 %v2127
    %2180 = vmatprep.subr.mxu0 %v2130
    %2181 = vmatpush1.msra.mxu0 %v2129
    %2182 = vmatprep.subr.mxu0 %v2132
    %2183 = vmatpush1.msra.mxu0 %v2131
    %2184 = vmatprep.subr.mxu0 %v2134
    %2185 = vmatpush1.msra.mxu0 %v2133
    %2186 = vmatprep.subr.mxu0 %v2136
    %2187 = vmatpush1.msra.mxu0 %v2135
    %2188 = vmatprep.subr.mxu0 %v2138
    %2189 = vmatpush1.msra.mxu0 %v2137
    %2190 = vmatprep.subr.mxu0 %v2140
    %2191 = vmatpush1.msra.mxu0 %v2139
    %2192 = vmatprep.subr.mxu0 %v2142
    %2193 = vmatpush1.msra.mxu0 %v2141
    %2194 = vmatprep.subr.mxu0 %v2144
    %2195 = vmatpush1.msra.mxu0 %v2143
    %2196 = vmatprep.subr.mxu0 %v2146
    %2197 = vmatpush1.msra.mxu0 %v2145
    %2198 = vmatprep.subr.mxu0 %v2148
    %2199 = vmatpush1.msra.mxu0 %v2147
    %2200 = vmatprep.subr.mxu0 %v2150
    %2201 = vmatpush1.msra.mxu0 %v2149
    %2202 = vmatprep.subr.mxu0 %v2152
    %2203 = vmatpush1.msra.mxu0 %v2151
    %2204 = vmatprep.subr.mxu0 %v2154
    %2205 = vmatpush1.msra.mxu0 %v2153
    %2206 = vmatprep.subr.mxu0 %v2156
    %2207 = vmatpush1.msra.mxu0 %v2155
    %2208 = vmatprep.subr.mxu0 %v2158
    %2209 = vmatpush1.msra.mxu0 %v2157
    %2210 = vmatprep.subr.mxu0 %v2160
    %2211 = vmatpush1.msra.mxu0 %v2159
    %2212 = vmatprep.subr.mxu0 %v2162
    %2213 = vmatpush1.msra.mxu0 %v2161
    %2214 = vmatprep.subr.mxu0 %v2164
    %2215 = vmatpush1.msra.mxu0 %v2163
    %2216 = vmatprep.subr.mxu0 %v2166
    %2217 = vmatpush1.msra.mxu0 %v2165
    %2218 = vmatprep.subr.mxu0 0.0
    %2219 = vmatpush1.msra.mxu0 0.0
    %2220 = vmatprep.subr.mxu0 0.0
    %2221 = vmatpush1.msra.mxu0 0.0
    %2222 = vmatprep.subr.mxu0 0.0
    %2223 = vmatpush1.msra.mxu0 0.0
    %2224 = vmatprep.subr.mxu0 0.0
    %2225 = vmatpush1.msra.mxu0 0.0
    %2226 = vmatprep.subr.mxu0 0.0
    %2227 = vmatpush1.msra.mxu0 0.0
    %2228 = vmatprep.subr.mxu0 0.0
    %2229 = vmatpush1.msra.mxu0 0.0
    %2230 = vmatprep.subr.mxu0 0.0
    %2231 = vmatpush1.msra.mxu0 0.0
    %2232 = vmatprep.subr.mxu0 0.0
    %2233 = vmatpush1.msra.mxu0 0.0
    %2234 = vmatprep.mubr.f32.mxu0 %v2168
    %2235 = vmatmul.mubr.f32.gmra.mrb[0].mxu0 %v2096
    %v2236 = vpop.f32.mrb[0].mxu0
    %v2237 = vadd.f32 0.0, %v2236
    %v2238 = vpop.f32.mrb[0].mxu0
    %v2239 = vadd.f32 0.0, %v2238
    %2240 = vdwg.mxu0
    %v2242 = vsel %vm1492, %v2118, 0
    %2244 = vmatprep.subr.mxu0 %v2120
    %2245 = vmatpush1.msra.mxu0 %v2119
    %2246 = vmatprep.subr.mxu0 %v2122
    %2247 = vmatpush1.msra.mxu0 %v2121
    %2248 = vmatprep.subr.mxu0 %v2124
    %2249 = vmatpush1.msra.mxu0 %v2123
    %2250 = vmatprep.subr.mxu0 %v2126
    %2251 = vmatpush1.msra.mxu0 %v2125
    %2252 = vmatprep.subr.mxu0 %v2128
    %2253 = vmatpush1.msra.mxu0 %v2127
    %2254 = vmatprep.subr.mxu0 %v2130
    %2255 = vmatpush1.msra.mxu0 %v2129
    %2256 = vmatprep.subr.mxu0 %v2132
    %2257 = vmatpush1.msra.mxu0 %v2131
    %2258 = vmatprep.subr.mxu0 %v2134
    %2259 = vmatpush1.msra.mxu0 %v2133
    %2260 = vmatprep.subr.mxu0 %v2136
    %2261 = vmatpush1.msra.mxu0 %v2135
    %2262 = vmatprep.subr.mxu0 %v2138
    %2263 = vmatpush1.msra.mxu0 %v2137
    %2264 = vmatprep.subr.mxu0 %v2140
    %2265 = vmatpush1.msra.mxu0 %v2139
    %2266 = vmatprep.subr.mxu0 %v2142
    %2267 = vmatpush1.msra.mxu0 %v2141
    %2268 = vmatprep.subr.mxu0 %v2144
    %2269 = vmatpush1.msra.mxu0 %v2143
    %2270 = vmatprep.subr.mxu0 %v2146
    %2271 = vmatpush1.msra.mxu0 %v2145
    %2272 = vmatprep.subr.mxu0 %v2148
    %2273 = vmatpush1.msra.mxu0 %v2147
    %2274 = vmatprep.subr.mxu0 %v2150
    %2275 = vmatpush1.msra.mxu0 %v2149
    %2276 = vmatprep.subr.mxu0 %v2152
    %2277 = vmatpush1.msra.mxu0 %v2151
    %2278 = vmatprep.subr.mxu0 %v2154
    %2279 = vmatpush1.msra.mxu0 %v2153
    %2280 = vmatprep.subr.mxu0 %v2156
    %2281 = vmatpush1.msra.mxu0 %v2155
    %2282 = vmatprep.subr.mxu0 %v2158
    %2283 = vmatpush1.msra.mxu0 %v2157
    %2284 = vmatprep.subr.mxu0 %v2160
    %2285 = vmatpush1.msra.mxu0 %v2159
    %2286 = vmatprep.subr.mxu0 %v2162
    %2287 = vmatpush1.msra.mxu0 %v2161
    %2288 = vmatprep.subr.mxu0 %v2164
    %2289 = vmatpush1.msra.mxu0 %v2163
    %2290 = vmatprep.subr.mxu0 %v2166
    %2291 = vmatpush1.msra.mxu0 %v2165
    %2292 = vmatprep.subr.mxu0 0.0
    %2293 = vmatpush1.msra.mxu0 0.0
    %2294 = vmatprep.subr.mxu0 0.0
    %2295 = vmatpush1.msra.mxu0 0.0
    %2296 = vmatprep.subr.mxu0 0.0
    %2297 = vmatpush1.msra.mxu0 0.0
    %2298 = vmatprep.subr.mxu0 0.0
    %2299 = vmatpush1.msra.mxu0 0.0
    %2300 = vmatprep.subr.mxu0 0.0
    %2301 = vmatpush1.msra.mxu0 0.0
    %2302 = vmatprep.subr.mxu0 0.0
    %2303 = vmatpush1.msra.mxu0 0.0
    %2304 = vmatprep.subr.mxu0 0.0
    %2305 = vmatpush1.msra.mxu0 0.0
    %2306 = vmatprep.subr.mxu0 0.0
    %2307 = vmatpush1.msra.mxu0 0.0
    %2308 = vmatprep.mubr.f32.mxu0 %v2242
    %2309 = vmatmul.mubr.f32.gmra.mrb[0].mxu0 %v2111
    %v2310 = vpop.f32.mrb[0].mxu0
    %v2311 = vadd.f32 0.0, %v2310
    %v2312 = vpop.f32.mrb[0].mxu0
    %v2313 = vadd.f32 0.0, %v2312
    %2314 = vdwg.mxu0
    %v2315 = vmul.f32 %v2237, %v2237
    %v2316 = vmul.f32 %v2239, %v2239
    %v2317 = vsub.f32 %v2311, %v2315
    %v2318 = vsub.f32 %v2313, %v2316
    %v2319 = vlaneseq
    %v2320 = vshrl.u32 %v2319, 7
    %v2321 = vsub.s32 0, %v2320
    %v2322 = vrot.slane %v2237, %v2321
    %v2323 = vlaneseq
    %v2324 = vshrl.u32 %v2323, 7
    %v2325 = vsub.s32 0, %v2324
    %v2326 = vrot.slane %v2239, %v2325
    %v2327 = vsub.f32 %v2089, %v2322
    %v2328 = vsub.f32 %v2090, %v2326
    %v2329 = vadd.f32 %v2317, 1e-05
    %v2330 = vadd.f32 %v2318, 1e-05
    %v2331 = vrsqrt.pop %v2329
    %v2332 = vrsqrt.pop %v2330
    %v2333 = vlaneseq
    %v2334 = vshrl.u32 %v2333, 7
    %v2335 = vsub.s32 0, %v2334
    %v2336 = vrot.slane %v2331, %v2335
    %v2337 = vlaneseq
    %v2338 = vshrl.u32 %v2337, 7
    %v2339 = vsub.s32 0, %v2338
    %v2340 = vrot.slane %v2332, %v2339
    %v2341 = vmul.f32 %v2327, %v2336
    %v2342 = vmul.f32 %v2328, %v2340
    %v2343 = vld [vmem:[%s11] sm:$0xff]
    %v2344 = vld [vmem:[%s11 + $0x8] sm:$0xff]
    %v2345 = vmul.f32 %v2341, %v2343
    %v2346 = vmul.f32 %v2342, %v2344
    %v2347 = vld [vmem:[%s12] sm:$0xff]
    %v2348 = vld [vmem:[%s12 + $0x8] sm:$0xff]
    %v2349 = vadd.f32 %v2345, %v2347
    %v2350 = vadd.f32 %v2346, %v2348
    %s2351 = scalar_lea.vmem %s13, 16
    %2352 = vst [vmem:[%s2351] sm:$0xff] %v2349
    %2353 = vst.msk [vmem:[%s2351 + $0x8] sm:$0xff] %vm1492, %v2350
    // Predicated region
    $region58: #{forward.1} parent=1 // pred_check
      _
    $region59: #{forward.1} parent=1 // pred_check_branch
      %2355 = sbr.rel (0) target = $region61
    $region60: #{forward.1} parent=1 // pred_region
      _
    $region61: #{forward.1} parent=1 // pred_fallthru
      _
    // Predicated region
    $region62: #{forward.1} parent=1 // pred_check
      _
    $region63: #{forward.1} parent=1 // pred_check_branch
      %2357 = sbr.rel (0) target = $region65
    $region64: #{forward.1} parent=1 // pred_region
      _
    $region65: #{forward.1} parent=1 // pred_fallthru
      _
    %2358 = vsyncpa [#allocation3], 1

</llo_original>
